<compile_context>
chip_gen: v7x
topology: tpu7x:2x2x1
jax: 0.10.0
libtpu: 0.0.40
codegen_flags: <defaults>
</compile_context>

<pallas_src>
import jax
import jax.numpy as jnp
from jax.experimental import pallas as pl
from jax.experimental.pallas import tpu as pltpu

HIDDEN_PAD = 128   # pad the 64-wide hidden layers up to a full lane width
OUT_PAD = 128      # pad the 1-wide output up to a full lane width (lane-dense vst)
BIAS_ROWS = 8      # 5 bias rows padded to a full sublane tile


def _mlp_kernel(x_ref, w1_ref, wstack_ref, bstack_ref, o_ref):
    """Fused 5-layer MLP; everything for one batch-tile stays in VMEM/vregs.

    w1_ref:     (IN, 128)         compute dtype (bf16 by default)
    wstack_ref: (4, 128, 128)     [W2, W3pad, W4pad, W5pad], compute dtype
    bstack_ref: (8, 128) f32      rows 0..4 = b1..b5 (zero-padded), rest zero
    o_ref:      (tile, 128) f32   real output is column 0
    """
    cdt = w1_ref.dtype

    # Layer 1: (tile, IN) @ (IN, 128)
    h = jnp.tanh(
        jnp.dot(x_ref[...].astype(cdt), w1_ref[...],
                preferred_element_type=jnp.float32)
        + bstack_ref[0])

    # Layers 2-4 (tanh): all (tile,128) @ (128,128) from the stacked weights.
    # Padded hidden columns stay exactly 0 (tanh(0)=0, padded weight rows/cols
    # and padded bias entries are 0), so column 0 of the final output matches
    # the unpadded computation.
    for l in range(3):
        h = jnp.tanh(
            jnp.dot(h.astype(cdt), wstack_ref[l],
                    preferred_element_type=jnp.float32)
            + bstack_ref[l + 1])

    # Final layer: no activation, lane-dense (padded to 128 output columns).
    y = jnp.dot(h.astype(cdt), wstack_ref[3],
                preferred_element_type=jnp.float32) + bstack_ref[4]
    o_ref[...] = y.astype(o_ref.dtype)


def _pad2(a, rows, cols):
    return jnp.pad(a, ((0, rows - a.shape[0]), (0, cols - a.shape[1])))


def prepare_params(params, compute_dtype=jnp.bfloat16):
    """One-time parameter prep (call once at init, NOT per forward).

    params: list of 5 (W, b) pairs in original shapes:
      W1 (IN,128) b1 (1,128); W2 (128,128) b2 (1,128); W3 (128,64) b3 (1,64);
      W4 (64,64)  b4 (1,64);  W5 (64,1)   b5 (1,1).

    Returns (w1, wstack, bstack):
      w1     (IN,128)      compute_dtype
      wstack (4,128,128)   compute_dtype   [W2, W3pad, W4pad, W5pad]
      bstack (8,128)       float32         rows 0..4 = b1..b5 zero-padded
    """
    (w1, b1), (w2, b2), (w3, b3), (w4, b4), (w5, b5) = params

    w3p = _pad2(w3, HIDDEN_PAD, HIDDEN_PAD)
    w4p = _pad2(w4, HIDDEN_PAD, HIDDEN_PAD)
    w5p = _pad2(w5, HIDDEN_PAD, OUT_PAD)
    wstack = jnp.stack([w2, w3p, w4p, w5p]).astype(compute_dtype)
    w1c = w1.astype(compute_dtype)

    bstack = jnp.zeros((BIAS_ROWS, HIDDEN_PAD), jnp.float32)
    for i, b in enumerate([b1, b2, b3, b4, b5]):
        bstack = bstack.at[i, : b.shape[-1]].set(
            b.reshape(-1).astype(jnp.float32))
    return w1c, wstack, bstack


def simple_net_forward(x, prepared, *, batch_tile=None):
    """x: (B, IN) float32; prepared = prepare_params(...).  Returns (B,1) f32."""
    w1, wstack, bstack = prepared
    B, IN = x.shape

    if batch_tile is None:
        # Small batches: whole batch in a single grid step (activations are
        # tiny vs VMEM); large batches: 512-row tiles to amortize step overhead.
        batch_tile = B if B <= 1024 else 512
    assert B % batch_tile == 0, (B, batch_tile)
    grid = (B // batch_tile,)

    x_spec = pl.BlockSpec((batch_tile, IN), lambda i: (i, 0))
    # Grid-invariant parameter blocks (same block index every step -> no re-DMA).
    w1_spec = pl.BlockSpec(w1.shape, lambda i: (0, 0))
    ws_spec = pl.BlockSpec(wstack.shape, lambda i: (0, 0, 0))
    bs_spec = pl.BlockSpec(bstack.shape, lambda i: (0, 0))
    o_spec = pl.BlockSpec((batch_tile, OUT_PAD), lambda i: (i, 0))

    # Only raise the scoped-VMEM limit if someone asks for a huge batch tile.
    vmem_limit = (96 * 1024 * 1024) if batch_tile >= 4096 else None

    out_padded = pl.pallas_call(
        _mlp_kernel,
        out_shape=jax.ShapeDtypeStruct((B, OUT_PAD), jnp.float32),
        grid_spec=pltpu.PrefetchScalarGridSpec(
            num_scalar_prefetch=0,
            grid=grid,
            in_specs=[x_spec, w1_spec, ws_spec, bs_spec],
            out_specs=o_spec,
        ),
        compiler_params=pltpu.CompilerParams(
            dimension_semantics=("parallel",),
            vmem_limit_bytes=vmem_limit),
    )(x, w1, wstack, bstack)

    # Real output is column 0 of the lane-dense block.
    return out_padded[:, :1]


def init_params(key, in_dim):
    """Deterministic init matching PyTorch nn.Linear default
    (U[-1/sqrt(fan_in), +1/sqrt(fan_in)]).  Weights stored (fan_in, fan_out);
    biases (1, fan_out).  Original (unpadded) shapes, float32."""
    dims = [(in_dim, 128), (128, 128), (128, 64), (64, 64), (64, 1)]
    params = []
    for (fan_in, fan_out) in dims:
        key, kw, kb = jax.random.split(key, 3)
        bound = 1.0 / jnp.sqrt(float(fan_in))
        w = jax.random.uniform(kw, (fan_in, fan_out), jnp.float32, -bound, bound)
        b = jax.random.uniform(kb, (1, fan_out), jnp.float32, -bound, bound)
        params.append((w, b))
    return params


def reference_forward(x, params):
    h = x
    for (w, b) in params[:-1]:
        h = jnp.tanh(h @ w + b)
    w, b = params[-1]
    return h @ w + b


if __name__ == "__main__":
    key = jax.random.PRNGKey(0)
    k_x, k_p = jax.random.split(key)

    B, IN = 256, 32
    x = jax.random.normal(k_x, (B, IN), jnp.float32)
    params = init_params(k_p, IN)

    # One-time parameter prep (padding + stacking + bf16 cast) outside the
    # per-call path.
    prepared = prepare_params(params, compute_dtype=jnp.bfloat16)
    prepared = jax.block_until_ready(prepared)

    # Default batch_tile=B -> grid=(1,): single step, no pipeline overhead.
    out = simple_net_forward(x, prepared)
    out = jax.block_until_ready(out)

    ref = reference_forward(x, params)  # f32 reference
    assert out.shape == (B, 1)
    # bf16 matmul operands with f32 accumulation through a tanh-bounded net:
    # error stays well under 5e-2 absolute.
    max_err = float(jnp.max(jnp.abs(out - ref)))
    assert max_err < 5e-2, f"mismatch vs reference, max abs err {max_err}"

    print("KERNEL_OK")
</pallas_src>

<mosaic_0001>
module attributes {stable_mosaic.version = 11 : i64} {
  func.func @_mlp_kernel(%arg0: i32, %arg1: memref<256x32xf32, #tpu.memory_space<vmem>>, %arg2: memref<32x128xbf16, #tpu.memory_space<vmem>>, %arg3: memref<4x128x128xbf16, #tpu.memory_space<vmem>>, %arg4: memref<8x128xf32, #tpu.memory_space<vmem>>, %arg5: memref<256x128xf32, #tpu.memory_space<vmem>>) attributes {dimension_semantics = [#tpu.dimension_semantics<parallel>], iteration_bounds = array<i64: 1>, scalar_prefetch = 0 : i64, scratch_operands = 0 : i64, tpu.core_type = #tpu.core_type<tc>, window_params = [{transform_indices = @transform_0, window_bounds = array<i64: 256, 32>}, {pipeline_mode = #tpu.pipeline_mode<synchronous>, transform_indices = @transform_1, window_bounds = array<i64: 32, 128>}, {pipeline_mode = #tpu.pipeline_mode<synchronous>, transform_indices = @transform_2, window_bounds = array<i64: 4, 128, 128>}, {pipeline_mode = #tpu.pipeline_mode<synchronous>, transform_indices = @transform_3, window_bounds = array<i64: 8, 128>}, {transform_indices = @transform_4, window_bounds = array<i64: 256, 128>}]} {
    %c0 = arith.constant 0 : index
    %c0_0 = arith.constant 0 : index
    %0 = vector.load %arg1[%c0, %c0_0] : memref<256x32xf32, #tpu.memory_space<vmem>>, vector<256x32xf32>
    %1 = arith.truncf %0 : vector<256x32xf32> to vector<256x32xbf16>
    %c0_1 = arith.constant 0 : index
    %c0_2 = arith.constant 0 : index
    %2 = vector.load %arg2[%c0_1, %c0_2] : memref<32x128xbf16, #tpu.memory_space<vmem>>, vector<32x128xbf16>
    %cst = arith.constant dense<0.000000e+00> : vector<256x128xf32>
    %3 = tpu.matmul %1, %2, %cst {dimension_numbers = #tpu.dot_dimension_numbers<[1], [0], [0], [1], [0, 0, 1, 1], [], []>} : vector<256x32xbf16>, vector<32x128xbf16>, vector<256x128xf32> -> vector<256x128xf32>
    %c0_3 = arith.constant 0 : index
    %c0_4 = arith.constant 0 : index
    %4 = vector.load %arg4[%c0_3, %c0_4] : memref<8x128xf32, #tpu.memory_space<vmem>>, vector<1x128xf32>
    %5 = vector.shape_cast %4 : vector<1x128xf32> to vector<128xf32>
    %6 = vector.shape_cast %5 : vector<128xf32> to vector<1x128xf32>
    %7 = vector.broadcast %6 : vector<1x128xf32> to vector<256x128xf32>
    %8 = arith.addf %3, %7 : vector<256x128xf32>
    %9 = math.tanh %8 : vector<256x128xf32>
    %10 = arith.truncf %9 : vector<256x128xf32> to vector<256x128xbf16>
    %c0_5 = arith.constant 0 : index
    %c0_6 = arith.constant 0 : index
    %c0_7 = arith.constant 0 : index
    %11 = vector.load %arg3[%c0_5, %c0_6, %c0_7] : memref<4x128x128xbf16, #tpu.memory_space<vmem>>, vector<1x128x128xbf16>
    %12 = vector.shape_cast %11 : vector<1x128x128xbf16> to vector<128x128xbf16>
    %cst_8 = arith.constant dense<0.000000e+00> : vector<256x128xf32>
    %13 = tpu.matmul %10, %12, %cst_8 {dimension_numbers = #tpu.dot_dimension_numbers<[1], [0], [0], [1], [0, 0, 1, 1], [], []>} : vector<256x128xbf16>, vector<128x128xbf16>, vector<256x128xf32> -> vector<256x128xf32>
    %c1 = arith.constant 1 : index
    %c0_9 = arith.constant 0 : index
    %14 = vector.load %arg4[%c1, %c0_9] : memref<8x128xf32, #tpu.memory_space<vmem>>, vector<1x128xf32>
    %15 = vector.shape_cast %14 : vector<1x128xf32> to vector<128xf32>
    %16 = vector.shape_cast %15 : vector<128xf32> to vector<1x128xf32>
    %17 = vector.broadcast %16 : vector<1x128xf32> to vector<256x128xf32>
    %18 = arith.addf %13, %17 : vector<256x128xf32>
    %19 = math.tanh %18 : vector<256x128xf32>
    %20 = arith.truncf %19 : vector<256x128xf32> to vector<256x128xbf16>
    %c1_10 = arith.constant 1 : index
    %c0_11 = arith.constant 0 : index
    %c0_12 = arith.constant 0 : index
    %21 = vector.load %arg3[%c1_10, %c0_11, %c0_12] : memref<4x128x128xbf16, #tpu.memory_space<vmem>>, vector<1x128x128xbf16>
    %22 = vector.shape_cast %21 : vector<1x128x128xbf16> to vector<128x128xbf16>
    %cst_13 = arith.constant dense<0.000000e+00> : vector<256x128xf32>
    %23 = tpu.matmul %20, %22, %cst_13 {dimension_numbers = #tpu.dot_dimension_numbers<[1], [0], [0], [1], [0, 0, 1, 1], [], []>} : vector<256x128xbf16>, vector<128x128xbf16>, vector<256x128xf32> -> vector<256x128xf32>
    %c2 = arith.constant 2 : index
    %c0_14 = arith.constant 0 : index
    %24 = vector.load %arg4[%c2, %c0_14] : memref<8x128xf32, #tpu.memory_space<vmem>>, vector<1x128xf32>
    %25 = vector.shape_cast %24 : vector<1x128xf32> to vector<128xf32>
    %26 = vector.shape_cast %25 : vector<128xf32> to vector<1x128xf32>
    %27 = vector.broadcast %26 : vector<1x128xf32> to vector<256x128xf32>
    %28 = arith.addf %23, %27 : vector<256x128xf32>
    %29 = math.tanh %28 : vector<256x128xf32>
    %30 = arith.truncf %29 : vector<256x128xf32> to vector<256x128xbf16>
    %c2_15 = arith.constant 2 : index
    %c0_16 = arith.constant 0 : index
    %c0_17 = arith.constant 0 : index
    %31 = vector.load %arg3[%c2_15, %c0_16, %c0_17] : memref<4x128x128xbf16, #tpu.memory_space<vmem>>, vector<1x128x128xbf16>
    %32 = vector.shape_cast %31 : vector<1x128x128xbf16> to vector<128x128xbf16>
    %cst_18 = arith.constant dense<0.000000e+00> : vector<256x128xf32>
    %33 = tpu.matmul %30, %32, %cst_18 {dimension_numbers = #tpu.dot_dimension_numbers<[1], [0], [0], [1], [0, 0, 1, 1], [], []>} : vector<256x128xbf16>, vector<128x128xbf16>, vector<256x128xf32> -> vector<256x128xf32>
    %c3 = arith.constant 3 : index
    %c0_19 = arith.constant 0 : index
    %34 = vector.load %arg4[%c3, %c0_19] : memref<8x128xf32, #tpu.memory_space<vmem>>, vector<1x128xf32>
    %35 = vector.shape_cast %34 : vector<1x128xf32> to vector<128xf32>
    %36 = vector.shape_cast %35 : vector<128xf32> to vector<1x128xf32>
    %37 = vector.broadcast %36 : vector<1x128xf32> to vector<256x128xf32>
    %38 = arith.addf %33, %37 : vector<256x128xf32>
    %39 = math.tanh %38 : vector<256x128xf32>
    %40 = arith.truncf %39 : vector<256x128xf32> to vector<256x128xbf16>
    %c3_20 = arith.constant 3 : index
    %c0_21 = arith.constant 0 : index
    %c0_22 = arith.constant 0 : index
    %41 = vector.load %arg3[%c3_20, %c0_21, %c0_22] : memref<4x128x128xbf16, #tpu.memory_space<vmem>>, vector<1x128x128xbf16>
    %42 = vector.shape_cast %41 : vector<1x128x128xbf16> to vector<128x128xbf16>
    %cst_23 = arith.constant dense<0.000000e+00> : vector<256x128xf32>
    %43 = tpu.matmul %40, %42, %cst_23 {dimension_numbers = #tpu.dot_dimension_numbers<[1], [0], [0], [1], [0, 0, 1, 1], [], []>} : vector<256x128xbf16>, vector<128x128xbf16>, vector<256x128xf32> -> vector<256x128xf32>
    %c4 = arith.constant 4 : index
    %c0_24 = arith.constant 0 : index
    %44 = vector.load %arg4[%c4, %c0_24] : memref<8x128xf32, #tpu.memory_space<vmem>>, vector<1x128xf32>
    %45 = vector.shape_cast %44 : vector<1x128xf32> to vector<128xf32>
    %46 = vector.shape_cast %45 : vector<128xf32> to vector<1x128xf32>
    %47 = vector.broadcast %46 : vector<1x128xf32> to vector<256x128xf32>
    %48 = arith.addf %43, %47 : vector<256x128xf32>
    %c0_25 = arith.constant 0 : index
    %c0_26 = arith.constant 0 : index
    %49 = vector.load %arg5[%c0_25, %c0_26] : memref<256x128xf32, #tpu.memory_space<vmem>>, vector<256x128xf32>
    tpu.vector_store %arg5[%c0_25, %c0_26], %48 {strides = array<i32>} : memref<256x128xf32, #tpu.memory_space<vmem>>, vector<256x128xf32>,
    return
  }
  func.func @transform_0(%arg0: i32) -> (i32, i32) {
    %c0_i32 = arith.constant 0 : i32
    %c0_i32_0 = arith.constant 0 : i32
    return %arg0, %c0_i32 : i32, i32
  }
  func.func @transform_1(%arg0: i32) -> (i32, i32) {
    %c0_i32 = arith.constant 0 : i32
    %c0_i32_0 = arith.constant 0 : i32
    %c0_i32_1 = arith.constant 0 : i32
    return %c0_i32, %c0_i32_0 : i32, i32
  }
  func.func @transform_2(%arg0: i32) -> (i32, i32, i32) {
    %c0_i32 = arith.constant 0 : i32
    %c0_i32_0 = arith.constant 0 : i32
    %c0_i32_1 = arith.constant 0 : i32
    %c0_i32_2 = arith.constant 0 : i32
    return %c0_i32, %c0_i32_0, %c0_i32_1 : i32, i32, i32
  }
  func.func @transform_3(%arg0: i32) -> (i32, i32) {
    %c0_i32 = arith.constant 0 : i32
    %c0_i32_0 = arith.constant 0 : i32
    %c0_i32_1 = arith.constant 0 : i32
    return %c0_i32, %c0_i32_0 : i32, i32
  }
  func.func @transform_4(%arg0: i32) -> (i32, i32) {
    %c0_i32 = arith.constant 0 : i32
    %c0_i32_0 = arith.constant 0 : i32
    return %arg0, %c0_i32 : i32, i32
  }
}

</mosaic_0001>

<llo_original>
// kernel: tpu_custom_call.1
$region0: #{tpu_custom_call.1}
  #allocation0 [shape = 'u32[]', space=smem, size = 0x4, offset = 0x4, fixed_abs, tag = 'smem constant byte address 0x4 - core index']
  #allocation1 [shape = 'u32[144,128]{1,0:T(1,128)}', space=vmem, size = 0x12000, scoped, tag = 'internal scratch']
  %s0 = inlined_call_operand.vmem [shape: f32[256,32], index: 0, kind: input, shape index: {}]
  %s1 = inlined_call_operand.vmem [shape: bf16[32,128], index: 1, kind: input, shape index: {}]
  %s2 = inlined_call_operand.vmem [shape: bf16[4,128,128], index: 2, kind: input, shape index: {}]
  %s3 = inlined_call_operand.vmem [shape: f32[8,128], index: 3, kind: input, shape index: {}]
  %s4 = inlined_call_operand.hbm [shape: f32[256,128], index: 4, kind: output, shape index: {}]
  %s5 = sld [smem:[#allocation0]]
  $region26: #{tpu_custom_call.1} parent=0
    _
  %s7 = ssub.s32 1, %s5
  %s8 = scalar_select 0, %s7, %s5
  $region1: #{tpu_custom_call.1} parent=0
    #allocation2 [shape = 'u8[131072]{0}', space=vmem, size = 0x20000, scoped, tag = 'output window, operand 0, single buffered']
    #allocation3 [shape = 's32[1]{0}', space=sflag, size = 0x4, scoped, tag = 'scoped memory for tpu_custom_call.1']
    %9 = vsyncpa [#allocation3], 0
    // Predicated region
    $region2: #{tpu_custom_call.1} parent=1 // pred_check
      _
    $region3: #{tpu_custom_call.1} parent=1 // pred_check_branch
      %11 = sbr.rel (0) target = $region5
    $region4: #{tpu_custom_call.1} parent=1 // pred_region
      _
    $region5: #{tpu_custom_call.1} parent=1 // pred_fallthru
      _
    // Predicated region
    $region6: #{tpu_custom_call.1} parent=1 // pred_check
      _
    $region7: #{tpu_custom_call.1} parent=1 // pred_check_branch
      %13 = sbr.rel (0) target = $region9
    $region8: #{tpu_custom_call.1} parent=1 // pred_region
      _
    $region9: #{tpu_custom_call.1} parent=1 // pred_fallthru
      _
    // Predicated region
    $region10: #{tpu_custom_call.1} parent=1 // pred_check
      _
    $region11: #{tpu_custom_call.1} parent=1 // pred_check_branch
      %15 = sbr.rel (0) target = $region13
    $region12: #{tpu_custom_call.1} parent=1 // pred_region
      _
    $region13: #{tpu_custom_call.1} parent=1 // pred_fallthru
      _
    // Predicated region
    $region14: #{tpu_custom_call.1} parent=1 // pred_check
      _
    $region15: #{tpu_custom_call.1} parent=1 // pred_check_branch
      %17 = sbr.rel (0) target = $region17
    $region16: #{tpu_custom_call.1} parent=1 // pred_region
      _
    $region17: #{tpu_custom_call.1} parent=1 // pred_fallthru
      _
    %v19 = vld [vmem:[%s0] sm:$0xff]
    %v20 = vld [vmem:[%s0 + $0x8] sm:$0xff]
    %v21 = vld [vmem:[%s0 + $0x10] sm:$0xff]
    %v22 = vld [vmem:[%s0 + $0x18] sm:$0xff]
    %v23 = vld [vmem:[%s0 + $0x20] sm:$0xff]
    %v24 = vld [vmem:[%s0 + $0x28] sm:$0xff]
    %v25 = vld [vmem:[%s0 + $0x30] sm:$0xff]
    %v26 = vld [vmem:[%s0 + $0x38] sm:$0xff]
    %v27 = vld [vmem:[%s0 + $0x40] sm:$0xff]
    %v28 = vld [vmem:[%s0 + $0x48] sm:$0xff]
    %v29 = vld [vmem:[%s0 + $0x50] sm:$0xff]
    %v30 = vld [vmem:[%s0 + $0x58] sm:$0xff]
    %v31 = vld [vmem:[%s0 + $0x60] sm:$0xff]
    %v32 = vld [vmem:[%s0 + $0x68] sm:$0xff]
    %v33 = vld [vmem:[%s0 + $0x70] sm:$0xff]
    %v34 = vld [vmem:[%s0 + $0x78] sm:$0xff]
    %v35 = vld [vmem:[%s0 + $0x80] sm:$0xff]
    %v36 = vld [vmem:[%s0 + $0x88] sm:$0xff]
    %v37 = vld [vmem:[%s0 + $0x90] sm:$0xff]
    %v38 = vld [vmem:[%s0 + $0x98] sm:$0xff]
    %v39 = vld [vmem:[%s0 + $0xa0] sm:$0xff]
    %v40 = vld [vmem:[%s0 + $0xa8] sm:$0xff]
    %v41 = vld [vmem:[%s0 + $0xb0] sm:$0xff]
    %v42 = vld [vmem:[%s0 + $0xb8] sm:$0xff]
    %v43 = vld [vmem:[%s0 + $0xc0] sm:$0xff]
    %v44 = vld [vmem:[%s0 + $0xc8] sm:$0xff]
    %v45 = vld [vmem:[%s0 + $0xd0] sm:$0xff]
    %v46 = vld [vmem:[%s0 + $0xd8] sm:$0xff]
    %v47 = vld [vmem:[%s0 + $0xe0] sm:$0xff]
    %v48 = vld [vmem:[%s0 + $0xe8] sm:$0xff]
    %v49 = vld [vmem:[%s0 + $0xf0] sm:$0xff]
    %v50 = vld [vmem:[%s0 + $0xf8] sm:$0xff]
    %v51 = vpack.c.bf16 %v20, %v19
    %v52 = vpack.c.bf16 %v22, %v21
    %v53 = vpack.c.bf16 %v24, %v23
    %v54 = vpack.c.bf16 %v26, %v25
    %v55 = vpack.c.bf16 %v28, %v27
    %v56 = vpack.c.bf16 %v30, %v29
    %v57 = vpack.c.bf16 %v32, %v31
    %v58 = vpack.c.bf16 %v34, %v33
    %v59 = vpack.c.bf16 %v36, %v35
    %v60 = vpack.c.bf16 %v38, %v37
    %v61 = vpack.c.bf16 %v40, %v39
    %v62 = vpack.c.bf16 %v42, %v41
    %v63 = vpack.c.bf16 %v44, %v43
    %v64 = vpack.c.bf16 %v46, %v45
    %v65 = vpack.c.bf16 %v48, %v47
    %v66 = vpack.c.bf16 %v50, %v49
    %v67 = vld [vmem:[%s1] sm:$0xf]
    %v68 = vld [vmem:[%s1 + $0x4] sm:$0xf]
    %v69 = vld [vmem:[%s1 + $0x8] sm:$0xf]
    %v70 = vld [vmem:[%s1 + $0xc] sm:$0xf]
    %v71 = vld [vmem:[%s3] sm:$0x1]
    %v72 = vlaneseq
    %v73 = vshrl.u32 %v72, 7
    %v74 = vsub.s32 0, %v73
    %v75 = vrot.slane %v71, %v74
    %v80 = vunpack.c.l.b16 %v67
    %v81 = vunpack.c.l.b16 %v68
    %v82 = vunpack.c.l.b16 %v69
    %v83 = vunpack.c.l.b16 %v70
    %v84 = vpack.c.b16 %v81, %v80
    %v85 = vpack.c.b16 %v83, %v82
    %vm88 = vcmask 261120
    %v90 = vsel %vm88, %v51, 0
    %v93 = vsel %vm88, %v52, 0
    %v96 = vsel %vm88, %v53, 0
    %v99 = vsel %vm88, %v54, 0
    %v102 = vsel %vm88, %v55, 0
    %v105 = vsel %vm88, %v56, 0
    %v108 = vsel %vm88, %v57, 0
    %v111 = vsel %vm88, %v58, 0
    %v114 = vsel %vm88, %v59, 0
    %v117 = vsel %vm88, %v60, 0
    %v120 = vsel %vm88, %v61, 0
    %v123 = vsel %vm88, %v62, 0
    %v126 = vsel %vm88, %v63, 0
    %v129 = vsel %vm88, %v64, 0
    %v132 = vsel %vm88, %v65, 0
    %v135 = vsel %vm88, %v66, 0
    %137 = vmatprep.subr.bf16.mxu0 0
    %138 = vmatpush1.bf16.msra.mxu0 %v84
    %139 = vmatprep.subr.bf16.mxu0 0
    %140 = vmatpush1.bf16.msra.mxu0 %v85
    %141 = vmatprep.subr.bf16.mxu0 0
    %142 = vmatpush1.bf16.msra.mxu0 0
    %143 = vmatprep.subr.bf16.mxu0 0
    %144 = vmatpush1.bf16.msra.mxu0 0
    %145 = vmatprep.subr.bf16.mxu0 0
    %146 = vmatpush1.bf16.msra.mxu0 0
    %147 = vmatprep.subr.bf16.mxu0 0
    %148 = vmatpush1.bf16.msra.mxu0 0
    %149 = vmatprep.subr.bf16.mxu0 0
    %150 = vmatpush1.bf16.msra.mxu0 0
    %151 = vmatprep.subr.bf16.mxu0 0
    %152 = vmatpush1.bf16.msra.mxu0 0
    %153 = vmatprep.subr.bf16.mxu0 0
    %154 = vmatpush1.bf16.msra.mxu0 0
    %155 = vmatprep.subr.bf16.mxu0 0
    %156 = vmatpush1.bf16.msra.mxu0 0
    %157 = vmatprep.subr.bf16.mxu0 0
    %158 = vmatpush1.bf16.msra.mxu0 0
    %159 = vmatprep.subr.bf16.mxu0 0
    %160 = vmatpush1.bf16.msra.mxu0 0
    %161 = vmatprep.subr.bf16.mxu0 0
    %162 = vmatpush1.bf16.msra.mxu0 0
    %163 = vmatprep.subr.bf16.mxu0 0
    %164 = vmatpush1.bf16.msra.mxu0 0
    %165 = vmatprep.subr.bf16.mxu0 0
    %166 = vmatpush1.bf16.msra.mxu0 0
    %167 = vmatprep.subr.bf16.mxu0 0
    %168 = vmatpush1.bf16.msra.mxu0 0
    %169 = vmatprep.mubr.bf16.mxu0 0
    %170 = vmatmul.mubr.bf16.gmra.mrb[0].mxu0 %v90
    %v171 = vpop.f32.mrb[0].mxu0
    %v172 = vadd.f32 %v75, %v171
    %v173 = vpop.f32.mrb[0].mxu0
    %v174 = vpop.f32.mrb[0].mxu0
    %v175 = vadd.f32 %v75, %v174
    %v176 = vpop.f32.mrb[0].mxu0
    %177 = vmatprep.mubr.bf16.mxu0 0
    %178 = vmatmul.mubr.bf16.gmra.mrb[0].mxu0 %v93
    %v179 = vpop.f32.mrb[0].mxu0
    %v180 = vadd.f32 %v75, %v179
    %v181 = vpop.f32.mrb[0].mxu0
    %v182 = vpop.f32.mrb[0].mxu0
    %v183 = vadd.f32 %v75, %v182
    %v184 = vpop.f32.mrb[0].mxu0
    %185 = vmatprep.mubr.bf16.mxu0 0
    %186 = vmatmul.mubr.bf16.gmra.mrb[0].mxu0 %v96
    %v187 = vpop.f32.mrb[0].mxu0
    %v188 = vadd.f32 %v75, %v187
    %v189 = vpop.f32.mrb[0].mxu0
    %v190 = vpop.f32.mrb[0].mxu0
    %v191 = vadd.f32 %v75, %v190
    %v192 = vpop.f32.mrb[0].mxu0
    %193 = vmatprep.mubr.bf16.mxu0 0
    %194 = vmatmul.mubr.bf16.gmra.mrb[0].mxu0 %v99
    %v195 = vpop.f32.mrb[0].mxu0
    %v196 = vadd.f32 %v75, %v195
    %v197 = vpop.f32.mrb[0].mxu0
    %v198 = vpop.f32.mrb[0].mxu0
    %v199 = vadd.f32 %v75, %v198
    %v200 = vpop.f32.mrb[0].mxu0
    %201 = vmatprep.mubr.bf16.mxu0 0
    %202 = vmatmul.mubr.bf16.gmra.mrb[0].mxu0 %v102
    %v203 = vpop.f32.mrb[0].mxu0
    %v204 = vadd.f32 %v75, %v203
    %v205 = vpop.f32.mrb[0].mxu0
    %v206 = vpop.f32.mrb[0].mxu0
    %v207 = vadd.f32 %v75, %v206
    %v208 = vpop.f32.mrb[0].mxu0
    %209 = vmatprep.mubr.bf16.mxu0 0
    %210 = vmatmul.mubr.bf16.gmra.mrb[0].mxu0 %v105
    %v211 = vpop.f32.mrb[0].mxu0
    %v212 = vadd.f32 %v75, %v211
    %v213 = vpop.f32.mrb[0].mxu0
    %v214 = vpop.f32.mrb[0].mxu0
    %v215 = vadd.f32 %v75, %v214
    %v216 = vpop.f32.mrb[0].mxu0
    %217 = vmatprep.mubr.bf16.mxu0 0
    %218 = vmatmul.mubr.bf16.gmra.mrb[0].mxu0 %v108
    %v219 = vpop.f32.mrb[0].mxu0
    %v220 = vadd.f32 %v75, %v219
    %v221 = vpop.f32.mrb[0].mxu0
    %v222 = vpop.f32.mrb[0].mxu0
    %v223 = vadd.f32 %v75, %v222
    %v224 = vpop.f32.mrb[0].mxu0
    %225 = vmatprep.mubr.bf16.mxu0 0
    %226 = vmatmul.mubr.bf16.gmra.mrb[0].mxu0 %v111
    %v227 = vpop.f32.mrb[0].mxu0
    %v228 = vadd.f32 %v75, %v227
    %v229 = vpop.f32.mrb[0].mxu0
    %v230 = vpop.f32.mrb[0].mxu0
    %v231 = vadd.f32 %v75, %v230
    %v232 = vpop.f32.mrb[0].mxu0
    %233 = vmatprep.mubr.bf16.mxu0 0
    %234 = vmatmul.mubr.bf16.gmra.mrb[0].mxu0 %v114
    %v235 = vpop.f32.mrb[0].mxu0
    %v236 = vadd.f32 %v75, %v235
    %v237 = vpop.f32.mrb[0].mxu0
    %v238 = vpop.f32.mrb[0].mxu0
    %v239 = vadd.f32 %v75, %v238
    %v240 = vpop.f32.mrb[0].mxu0
    %241 = vmatprep.mubr.bf16.mxu0 0
    %242 = vmatmul.mubr.bf16.gmra.mrb[0].mxu0 %v117
    %v243 = vpop.f32.mrb[0].mxu0
    %v244 = vadd.f32 %v75, %v243
    %v245 = vpop.f32.mrb[0].mxu0
    %v246 = vpop.f32.mrb[0].mxu0
    %v247 = vadd.f32 %v75, %v246
    %v248 = vpop.f32.mrb[0].mxu0
    %249 = vmatprep.mubr.bf16.mxu0 0
    %250 = vmatmul.mubr.bf16.gmra.mrb[0].mxu0 %v120
    %v251 = vpop.f32.mrb[0].mxu0
    %v252 = vadd.f32 %v75, %v251
    %v253 = vpop.f32.mrb[0].mxu0
    %v254 = vpop.f32.mrb[0].mxu0
    %v255 = vadd.f32 %v75, %v254
    %v256 = vpop.f32.mrb[0].mxu0
    %257 = vmatprep.mubr.bf16.mxu0 0
    %258 = vmatmul.mubr.bf16.gmra.mrb[0].mxu0 %v123
    %v259 = vpop.f32.mrb[0].mxu0
    %v260 = vadd.f32 %v75, %v259
    %v261 = vpop.f32.mrb[0].mxu0
    %v262 = vpop.f32.mrb[0].mxu0
    %v263 = vadd.f32 %v75, %v262
    %v264 = vpop.f32.mrb[0].mxu0
    %265 = vmatprep.mubr.bf16.mxu0 0
    %266 = vmatmul.mubr.bf16.gmra.mrb[0].mxu0 %v126
    %v267 = vpop.f32.mrb[0].mxu0
    %v268 = vadd.f32 %v75, %v267
    %v269 = vpop.f32.mrb[0].mxu0
    %v270 = vpop.f32.mrb[0].mxu0
    %v271 = vadd.f32 %v75, %v270
    %v272 = vpop.f32.mrb[0].mxu0
    %273 = vmatprep.mubr.bf16.mxu0 0
    %274 = vmatmul.mubr.bf16.gmra.mrb[0].mxu0 %v129
    %v275 = vpop.f32.mrb[0].mxu0
    %v276 = vadd.f32 %v75, %v275
    %v277 = vpop.f32.mrb[0].mxu0
    %v278 = vpop.f32.mrb[0].mxu0
    %v279 = vadd.f32 %v75, %v278
    %v280 = vpop.f32.mrb[0].mxu0
    %281 = vmatprep.mubr.bf16.mxu0 0
    %282 = vmatmul.mubr.bf16.gmra.mrb[0].mxu0 %v132
    %v283 = vpop.f32.mrb[0].mxu0
    %v284 = vadd.f32 %v75, %v283
    %v285 = vpop.f32.mrb[0].mxu0
    %v286 = vpop.f32.mrb[0].mxu0
    %v287 = vadd.f32 %v75, %v286
    %v288 = vpop.f32.mrb[0].mxu0
    %289 = vmatprep.mubr.bf16.mxu0 0
    %290 = vmatmul.mubr.bf16.gmra.mrb[0].mxu0 %v135
    %v291 = vpop.f32.mrb[0].mxu0
    %v292 = vadd.f32 %v75, %v291
    %v293 = vpop.f32.mrb[0].mxu0
    %v294 = vpop.f32.mrb[0].mxu0
    %v295 = vadd.f32 %v75, %v294
    %v296 = vpop.f32.mrb[0].mxu0
    %297 = vdwg.mxu0
    %v298 = vtanh.pop %v172
    %v299 = vtanh.pop %v175
    %v300 = vtanh.pop %v180
    %v301 = vtanh.pop %v183
    %v302 = vtanh.pop %v188
    %v303 = vtanh.pop %v191
    %v304 = vtanh.pop %v196
    %v305 = vtanh.pop %v199
    %v306 = vtanh.pop %v204
    %v307 = vtanh.pop %v207
    %v308 = vtanh.pop %v212
    %v309 = vtanh.pop %v215
    %v310 = vtanh.pop %v220
    %v311 = vtanh.pop %v223
    %v312 = vtanh.pop %v228
    %v313 = vtanh.pop %v231
    %v314 = vtanh.pop %v236
    %v315 = vtanh.pop %v239
    %v316 = vtanh.pop %v244
    %v317 = vtanh.pop %v247
    %v318 = vtanh.pop %v252
    %v319 = vtanh.pop %v255
    %v320 = vtanh.pop %v260
    %v321 = vtanh.pop %v263
    %v322 = vtanh.pop %v268
    %v323 = vtanh.pop %v271
    %v324 = vtanh.pop %v276
    %v325 = vtanh.pop %v279
    %v326 = vtanh.pop %v284
    %v327 = vtanh.pop %v287
    %v328 = vtanh.pop %v292
    %v329 = vtanh.pop %v295
    %v330 = vpack.c.bf16 %v299, %v298
    %v331 = vpack.c.bf16 %v301, %v300
    %v332 = vpack.c.bf16 %v303, %v302
    %v333 = vpack.c.bf16 %v305, %v304
    %v334 = vpack.c.bf16 %v307, %v306
    %v335 = vpack.c.bf16 %v309, %v308
    %v336 = vpack.c.bf16 %v311, %v310
    %v337 = vpack.c.bf16 %v313, %v312
    %v338 = vpack.c.bf16 %v315, %v314
    %v339 = vpack.c.bf16 %v317, %v316
    %v340 = vpack.c.bf16 %v319, %v318
    %v341 = vpack.c.bf16 %v321, %v320
    %v342 = vpack.c.bf16 %v323, %v322
    %v343 = vpack.c.bf16 %v325, %v324
    %v344 = vpack.c.bf16 %v327, %v326
    %v345 = vpack.c.bf16 %v329, %v328
    %v346 = vld [vmem:[%s2] sm:$0xf]
    %v347 = vld [vmem:[%s2 + $0x4] sm:$0xf]
    %v348 = vld [vmem:[%s2 + $0x8] sm:$0xf]
    %v349 = vld [vmem:[%s2 + $0xc] sm:$0xf]
    %v350 = vld [vmem:[%s2 + $0x10] sm:$0xf]
    %v351 = vld [vmem:[%s2 + $0x14] sm:$0xf]
    %v352 = vld [vmem:[%s2 + $0x18] sm:$0xf]
    %v353 = vld [vmem:[%s2 + $0x1c] sm:$0xf]
    %v354 = vld [vmem:[%s2 + $0x20] sm:$0xf]
    %v355 = vld [vmem:[%s2 + $0x24] sm:$0xf]
    %v356 = vld [vmem:[%s2 + $0x28] sm:$0xf]
    %v357 = vld [vmem:[%s2 + $0x2c] sm:$0xf]
    %v358 = vld [vmem:[%s2 + $0x30] sm:$0xf]
    %v359 = vld [vmem:[%s2 + $0x34] sm:$0xf]
    %v360 = vld [vmem:[%s2 + $0x38] sm:$0xf]
    %v361 = vld [vmem:[%s2 + $0x3c] sm:$0xf]
    %v362 = vld [vmem:[%s3 + $0x1] sm:$0x1]
    %v363 = vlaneseq
    %v364 = vshrl.u32 %v363, 7
    %v365 = vsub.s32 0, %v364
    %v366 = vrot.slane %v362, %v365
    %v383 = vunpack.c.l.b16 %v346
    %v384 = vunpack.c.l.b16 %v347
    %v385 = vunpack.c.l.b16 %v348
    %v386 = vunpack.c.l.b16 %v349
    %v387 = vunpack.c.l.b16 %v350
    %v388 = vunpack.c.l.b16 %v351
    %v389 = vunpack.c.l.b16 %v352
    %v390 = vunpack.c.l.b16 %v353
    %v391 = vunpack.c.l.b16 %v354
    %v392 = vunpack.c.l.b16 %v355
    %v393 = vunpack.c.l.b16 %v356
    %v394 = vunpack.c.l.b16 %v357
    %v395 = vunpack.c.l.b16 %v358
    %v396 = vunpack.c.l.b16 %v359
    %v397 = vunpack.c.l.b16 %v360
    %v398 = vunpack.c.l.b16 %v361
    %v399 = vpack.c.b16 %v384, %v383
    %v400 = vpack.c.b16 %v386, %v385
    %v401 = vpack.c.b16 %v388, %v387
    %v402 = vpack.c.b16 %v390, %v389
    %v403 = vpack.c.b16 %v392, %v391
    %v404 = vpack.c.b16 %v394, %v393
    %v405 = vpack.c.b16 %v396, %v395
    %v406 = vpack.c.b16 %v398, %v397
    %415 = vmatprep.subr.bf16.mxu0 0
    %416 = vmatpush1.bf16.msra.mxu0 %v399
    %417 = vmatprep.subr.bf16.mxu0 0
    %418 = vmatpush1.bf16.msra.mxu0 %v400
    %419 = vmatprep.subr.bf16.mxu0 0
    %420 = vmatpush1.bf16.msra.mxu0 %v401
    %421 = vmatprep.subr.bf16.mxu0 0
    %422 = vmatpush1.bf16.msra.mxu0 %v402
    %423 = vmatprep.subr.bf16.mxu0 0
    %424 = vmatpush1.bf16.msra.mxu0 %v403
    %425 = vmatprep.subr.bf16.mxu0 0
    %426 = vmatpush1.bf16.msra.mxu0 %v404
    %427 = vmatprep.subr.bf16.mxu0 0
    %428 = vmatpush1.bf16.msra.mxu0 %v405
    %429 = vmatprep.subr.bf16.mxu0 0
    %430 = vmatpush1.bf16.msra.mxu0 %v406
    %431 = vmatprep.subr.bf16.mxu0 0
    %432 = vmatpush1.bf16.msra.mxu0 0
    %433 = vmatprep.subr.bf16.mxu0 0
    %434 = vmatpush1.bf16.msra.mxu0 0
    %435 = vmatprep.subr.bf16.mxu0 0
    %436 = vmatpush1.bf16.msra.mxu0 0
    %437 = vmatprep.subr.bf16.mxu0 0
    %438 = vmatpush1.bf16.msra.mxu0 0
    %439 = vmatprep.subr.bf16.mxu0 0
    %440 = vmatpush1.bf16.msra.mxu0 0
    %441 = vmatprep.subr.bf16.mxu0 0
    %442 = vmatpush1.bf16.msra.mxu0 0
    %443 = vmatprep.subr.bf16.mxu0 0
    %444 = vmatpush1.bf16.msra.mxu0 0
    %445 = vmatprep.subr.bf16.mxu0 0
    %446 = vmatpush1.bf16.msra.mxu0 0
    %447 = vmatprep.mubr.bf16.mxu0 0
    %448 = vmatmul.mubr.bf16.gmra.mrb[0].mxu0 %v330
    %v449 = vpop.f32.mrb[0].mxu0
    %v450 = vadd.f32 %v366, %v449
    %v451 = vpop.f32.mrb[0].mxu0
    %v452 = vpop.f32.mrb[0].mxu0
    %v453 = vadd.f32 %v366, %v452
    %v454 = vpop.f32.mrb[0].mxu0
    %455 = vmatprep.mubr.bf16.mxu0 0
    %456 = vmatmul.mubr.bf16.gmra.mrb[0].mxu0 %v331
    %v457 = vpop.f32.mrb[0].mxu0
    %v458 = vadd.f32 %v366, %v457
    %v459 = vpop.f32.mrb[0].mxu0
    %v460 = vpop.f32.mrb[0].mxu0
    %v461 = vadd.f32 %v366, %v460
    %v462 = vpop.f32.mrb[0].mxu0
    %463 = vmatprep.mubr.bf16.mxu0 0
    %464 = vmatmul.mubr.bf16.gmra.mrb[0].mxu0 %v332
    %v465 = vpop.f32.mrb[0].mxu0
    %v466 = vadd.f32 %v366, %v465
    %v467 = vpop.f32.mrb[0].mxu0
    %v468 = vpop.f32.mrb[0].mxu0
    %v469 = vadd.f32 %v366, %v468
    %v470 = vpop.f32.mrb[0].mxu0
    %471 = vmatprep.mubr.bf16.mxu0 0
    %472 = vmatmul.mubr.bf16.gmra.mrb[0].mxu0 %v333
    %v473 = vpop.f32.mrb[0].mxu0
    %v474 = vadd.f32 %v366, %v473
    %v475 = vpop.f32.mrb[0].mxu0
    %v476 = vpop.f32.mrb[0].mxu0
    %v477 = vadd.f32 %v366, %v476
    %v478 = vpop.f32.mrb[0].mxu0
    %479 = vmatprep.mubr.bf16.mxu0 0
    %480 = vmatmul.mubr.bf16.gmra.mrb[0].mxu0 %v334
    %v481 = vpop.f32.mrb[0].mxu0
    %v482 = vadd.f32 %v366, %v481
    %v483 = vpop.f32.mrb[0].mxu0
    %v484 = vpop.f32.mrb[0].mxu0
    %v485 = vadd.f32 %v366, %v484
    %v486 = vpop.f32.mrb[0].mxu0
    %487 = vmatprep.mubr.bf16.mxu0 0
    %488 = vmatmul.mubr.bf16.gmra.mrb[0].mxu0 %v335
    %v489 = vpop.f32.mrb[0].mxu0
    %v490 = vadd.f32 %v366, %v489
    %v491 = vpop.f32.mrb[0].mxu0
    %v492 = vpop.f32.mrb[0].mxu0
    %v493 = vadd.f32 %v366, %v492
    %v494 = vpop.f32.mrb[0].mxu0
    %495 = vmatprep.mubr.bf16.mxu0 0
    %496 = vmatmul.mubr.bf16.gmra.mrb[0].mxu0 %v336
    %v497 = vpop.f32.mrb[0].mxu0
    %v498 = vadd.f32 %v366, %v497
    %v499 = vpop.f32.mrb[0].mxu0
    %v500 = vpop.f32.mrb[0].mxu0
    %v501 = vadd.f32 %v366, %v500
    %v502 = vpop.f32.mrb[0].mxu0
    %503 = vmatprep.mubr.bf16.mxu0 0
    %504 = vmatmul.mubr.bf16.gmra.mrb[0].mxu0 %v337
    %v505 = vpop.f32.mrb[0].mxu0
    %v506 = vadd.f32 %v366, %v505
    %v507 = vpop.f32.mrb[0].mxu0
    %v508 = vpop.f32.mrb[0].mxu0
    %v509 = vadd.f32 %v366, %v508
    %v510 = vpop.f32.mrb[0].mxu0
    %511 = vmatprep.mubr.bf16.mxu0 0
    %512 = vmatmul.mubr.bf16.gmra.mrb[0].mxu0 %v338
    %v513 = vpop.f32.mrb[0].mxu0
    %v514 = vadd.f32 %v366, %v513
    %v515 = vpop.f32.mrb[0].mxu0
    %v516 = vpop.f32.mrb[0].mxu0
    %v517 = vadd.f32 %v366, %v516
    %v518 = vpop.f32.mrb[0].mxu0
    %519 = vmatprep.mubr.bf16.mxu0 0
    %520 = vmatmul.mubr.bf16.gmra.mrb[0].mxu0 %v339
    %v521 = vpop.f32.mrb[0].mxu0
    %v522 = vadd.f32 %v366, %v521
    %v523 = vpop.f32.mrb[0].mxu0
    %v524 = vpop.f32.mrb[0].mxu0
    %v525 = vadd.f32 %v366, %v524
    %v526 = vpop.f32.mrb[0].mxu0
    %527 = vmatprep.mubr.bf16.mxu0 0
    %528 = vmatmul.mubr.bf16.gmra.mrb[0].mxu0 %v340
    %v529 = vpop.f32.mrb[0].mxu0
    %v530 = vadd.f32 %v366, %v529
    %v531 = vpop.f32.mrb[0].mxu0
    %v532 = vpop.f32.mrb[0].mxu0
    %v533 = vadd.f32 %v366, %v532
    %v534 = vpop.f32.mrb[0].mxu0
    %535 = vmatprep.mubr.bf16.mxu0 0
    %536 = vmatmul.mubr.bf16.gmra.mrb[0].mxu0 %v341
    %v537 = vpop.f32.mrb[0].mxu0
    %v538 = vadd.f32 %v366, %v537
    %v539 = vpop.f32.mrb[0].mxu0
    %v540 = vpop.f32.mrb[0].mxu0
    %v541 = vadd.f32 %v366, %v540
    %v542 = vpop.f32.mrb[0].mxu0
    %543 = vmatprep.mubr.bf16.mxu0 0
    %544 = vmatmul.mubr.bf16.gmra.mrb[0].mxu0 %v342
    %v545 = vpop.f32.mrb[0].mxu0
    %v546 = vadd.f32 %v366, %v545
    %v547 = vpop.f32.mrb[0].mxu0
    %v548 = vpop.f32.mrb[0].mxu0
    %v549 = vadd.f32 %v366, %v548
    %v550 = vpop.f32.mrb[0].mxu0
    %551 = vmatprep.mubr.bf16.mxu0 0
    %552 = vmatmul.mubr.bf16.gmra.mrb[0].mxu0 %v343
    %v553 = vpop.f32.mrb[0].mxu0
    %v554 = vadd.f32 %v366, %v553
    %v555 = vpop.f32.mrb[0].mxu0
    %v556 = vpop.f32.mrb[0].mxu0
    %v557 = vadd.f32 %v366, %v556
    %v558 = vpop.f32.mrb[0].mxu0
    %559 = vmatprep.mubr.bf16.mxu0 0
    %560 = vmatmul.mubr.bf16.gmra.mrb[0].mxu0 %v344
    %v561 = vpop.f32.mrb[0].mxu0
    %v562 = vadd.f32 %v366, %v561
    %v563 = vpop.f32.mrb[0].mxu0
    %v564 = vpop.f32.mrb[0].mxu0
    %v565 = vadd.f32 %v366, %v564
    %v566 = vpop.f32.mrb[0].mxu0
    %567 = vmatprep.mubr.bf16.mxu0 0
    %568 = vmatmul.mubr.bf16.gmra.mrb[0].mxu0 %v345
    %v569 = vpop.f32.mrb[0].mxu0
    %v570 = vadd.f32 %v366, %v569
    %v571 = vpop.f32.mrb[0].mxu0
    %v572 = vpop.f32.mrb[0].mxu0
    %v573 = vadd.f32 %v366, %v572
    %v574 = vpop.f32.mrb[0].mxu0
    %575 = vdwg.mxu0
    %v576 = vtanh.pop %v450
    %v577 = vtanh.pop %v453
    %v578 = vtanh.pop %v458
    %v579 = vtanh.pop %v461
    %v580 = vtanh.pop %v466
    %v581 = vtanh.pop %v469
    %v582 = vtanh.pop %v474
    %v583 = vtanh.pop %v477
    %v584 = vtanh.pop %v482
    %v585 = vtanh.pop %v485
    %v586 = vtanh.pop %v490
    %v587 = vtanh.pop %v493
    %v588 = vtanh.pop %v498
    %v589 = vtanh.pop %v501
    %v590 = vtanh.pop %v506
    %v591 = vtanh.pop %v509
    %v592 = vtanh.pop %v514
    %v593 = vtanh.pop %v517
    %v594 = vtanh.pop %v522
    %v595 = vtanh.pop %v525
    %v596 = vtanh.pop %v530
    %v597 = vtanh.pop %v533
    %v598 = vtanh.pop %v538
    %v599 = vtanh.pop %v541
    %v600 = vtanh.pop %v546
    %v601 = vtanh.pop %v549
    %v602 = vtanh.pop %v554
    %v603 = vtanh.pop %v557
    %v604 = vtanh.pop %v562
    %v605 = vtanh.pop %v565
    %v606 = vtanh.pop %v570
    %v607 = vtanh.pop %v573
    %v608 = vpack.c.bf16 %v577, %v576
    %v609 = vpack.c.bf16 %v579, %v578
    %v610 = vpack.c.bf16 %v581, %v580
    %v611 = vpack.c.bf16 %v583, %v582
    %v612 = vpack.c.bf16 %v585, %v584
    %v613 = vpack.c.bf16 %v587, %v586
    %v614 = vpack.c.bf16 %v589, %v588
    %v615 = vpack.c.bf16 %v591, %v590
    %v616 = vpack.c.bf16 %v593, %v592
    %v617 = vpack.c.bf16 %v595, %v594
    %v618 = vpack.c.bf16 %v597, %v596
    %v619 = vpack.c.bf16 %v599, %v598
    %v620 = vpack.c.bf16 %v601, %v600
    %v621 = vpack.c.bf16 %v603, %v602
    %v622 = vpack.c.bf16 %v605, %v604
    %v623 = vpack.c.bf16 %v607, %v606
    %s624 = scalar_lea.vmem %s2, 64
    %v625 = vld [vmem:[%s624] sm:$0xf]
    %v626 = vld [vmem:[%s624 + $0x4] sm:$0xf]
    %v627 = vld [vmem:[%s624 + $0x8] sm:$0xf]
    %v628 = vld [vmem:[%s624 + $0xc] sm:$0xf]
    %v629 = vld [vmem:[%s624 + $0x10] sm:$0xf]
    %v630 = vld [vmem:[%s624 + $0x14] sm:$0xf]
    %v631 = vld [vmem:[%s624 + $0x18] sm:$0xf]
    %v632 = vld [vmem:[%s624 + $0x1c] sm:$0xf]
    %v633 = vld [vmem:[%s624 + $0x20] sm:$0xf]
    %v634 = vld [vmem:[%s624 + $0x24] sm:$0xf]
    %v635 = vld [vmem:[%s624 + $0x28] sm:$0xf]
    %v636 = vld [vmem:[%s624 + $0x2c] sm:$0xf]
    %v637 = vld [vmem:[%s624 + $0x30] sm:$0xf]
    %v638 = vld [vmem:[%s624 + $0x34] sm:$0xf]
    %v639 = vld [vmem:[%s624 + $0x38] sm:$0xf]
    %v640 = vld [vmem:[%s624 + $0x3c] sm:$0xf]
    %v641 = vld [vmem:[%s3 + $0x2] sm:$0x1]
    %v642 = vlaneseq
    %v643 = vshrl.u32 %v642, 7
    %v644 = vsub.s32 0, %v643
    %v645 = vrot.slane %v641, %v644
    %v662 = vunpack.c.l.b16 %v625
    %v663 = vunpack.c.l.b16 %v626
    %v664 = vunpack.c.l.b16 %v627
    %v665 = vunpack.c.l.b16 %v628
    %v666 = vunpack.c.l.b16 %v629
    %v667 = vunpack.c.l.b16 %v630
    %v668 = vunpack.c.l.b16 %v631
    %v669 = vunpack.c.l.b16 %v632
    %v670 = vunpack.c.l.b16 %v633
    %v671 = vunpack.c.l.b16 %v634
    %v672 = vunpack.c.l.b16 %v635
    %v673 = vunpack.c.l.b16 %v636
    %v674 = vunpack.c.l.b16 %v637
    %v675 = vunpack.c.l.b16 %v638
    %v676 = vunpack.c.l.b16 %v639
    %v677 = vunpack.c.l.b16 %v640
    %v678 = vpack.c.b16 %v663, %v662
    %v679 = vpack.c.b16 %v665, %v664
    %v680 = vpack.c.b16 %v667, %v666
    %v681 = vpack.c.b16 %v669, %v668
    %v682 = vpack.c.b16 %v671, %v670
    %v683 = vpack.c.b16 %v673, %v672
    %v684 = vpack.c.b16 %v675, %v674
    %v685 = vpack.c.b16 %v677, %v676
    %694 = vmatprep.subr.bf16.mxu0 0
    %695 = vmatpush1.bf16.msra.mxu0 %v678
    %696 = vmatprep.subr.bf16.mxu0 0
    %697 = vmatpush1.bf16.msra.mxu0 %v679
    %698 = vmatprep.subr.bf16.mxu0 0
    %699 = vmatpush1.bf16.msra.mxu0 %v680
    %700 = vmatprep.subr.bf16.mxu0 0
    %701 = vmatpush1.bf16.msra.mxu0 %v681
    %702 = vmatprep.subr.bf16.mxu0 0
    %703 = vmatpush1.bf16.msra.mxu0 %v682
    %704 = vmatprep.subr.bf16.mxu0 0
    %705 = vmatpush1.bf16.msra.mxu0 %v683
    %706 = vmatprep.subr.bf16.mxu0 0
    %707 = vmatpush1.bf16.msra.mxu0 %v684
    %708 = vmatprep.subr.bf16.mxu0 0
    %709 = vmatpush1.bf16.msra.mxu0 %v685
    %710 = vmatprep.subr.bf16.mxu0 0
    %711 = vmatpush1.bf16.msra.mxu0 0
    %712 = vmatprep.subr.bf16.mxu0 0
    %713 = vmatpush1.bf16.msra.mxu0 0
    %714 = vmatprep.subr.bf16.mxu0 0
    %715 = vmatpush1.bf16.msra.mxu0 0
    %716 = vmatprep.subr.bf16.mxu0 0
    %717 = vmatpush1.bf16.msra.mxu0 0
    %718 = vmatprep.subr.bf16.mxu0 0
    %719 = vmatpush1.bf16.msra.mxu0 0
    %720 = vmatprep.subr.bf16.mxu0 0
    %721 = vmatpush1.bf16.msra.mxu0 0
    %722 = vmatprep.subr.bf16.mxu0 0
    %723 = vmatpush1.bf16.msra.mxu0 0
    %724 = vmatprep.subr.bf16.mxu0 0
    %725 = vmatpush1.bf16.msra.mxu0 0
    %726 = vmatprep.mubr.bf16.mxu0 0
    %727 = vmatmul.mubr.bf16.gmra.mrb[0].mxu0 %v608
    %v728 = vpop.f32.mrb[0].mxu0
    %v729 = vadd.f32 %v645, %v728
    %v730 = vpop.f32.mrb[0].mxu0
    %v731 = vpop.f32.mrb[0].mxu0
    %v732 = vadd.f32 %v645, %v731
    %v733 = vpop.f32.mrb[0].mxu0
    %734 = vmatprep.mubr.bf16.mxu0 0
    %735 = vmatmul.mubr.bf16.gmra.mrb[0].mxu0 %v609
    %v736 = vpop.f32.mrb[0].mxu0
    %v737 = vadd.f32 %v645, %v736
    %v738 = vpop.f32.mrb[0].mxu0
    %v739 = vpop.f32.mrb[0].mxu0
    %v740 = vadd.f32 %v645, %v739
    %v741 = vpop.f32.mrb[0].mxu0
    %742 = vmatprep.mubr.bf16.mxu0 0
    %743 = vmatmul.mubr.bf16.gmra.mrb[0].mxu0 %v610
    %v744 = vpop.f32.mrb[0].mxu0
    %v745 = vadd.f32 %v645, %v744
    %v746 = vpop.f32.mrb[0].mxu0
    %v747 = vpop.f32.mrb[0].mxu0
    %v748 = vadd.f32 %v645, %v747
    %v749 = vpop.f32.mrb[0].mxu0
    %750 = vmatprep.mubr.bf16.mxu0 0
    %751 = vmatmul.mubr.bf16.gmra.mrb[0].mxu0 %v611
    %v752 = vpop.f32.mrb[0].mxu0
    %v753 = vadd.f32 %v645, %v752
    %v754 = vpop.f32.mrb[0].mxu0
    %v755 = vpop.f32.mrb[0].mxu0
    %v756 = vadd.f32 %v645, %v755
    %v757 = vpop.f32.mrb[0].mxu0
    %758 = vmatprep.mubr.bf16.mxu0 0
    %759 = vmatmul.mubr.bf16.gmra.mrb[0].mxu0 %v612
    %v760 = vpop.f32.mrb[0].mxu0
    %v761 = vadd.f32 %v645, %v760
    %v762 = vpop.f32.mrb[0].mxu0
    %v763 = vpop.f32.mrb[0].mxu0
    %v764 = vadd.f32 %v645, %v763
    %v765 = vpop.f32.mrb[0].mxu0
    %766 = vmatprep.mubr.bf16.mxu0 0
    %767 = vmatmul.mubr.bf16.gmra.mrb[0].mxu0 %v613
    %v768 = vpop.f32.mrb[0].mxu0
    %v769 = vadd.f32 %v645, %v768
    %v770 = vpop.f32.mrb[0].mxu0
    %v771 = vpop.f32.mrb[0].mxu0
    %v772 = vadd.f32 %v645, %v771
    %v773 = vpop.f32.mrb[0].mxu0
    %774 = vmatprep.mubr.bf16.mxu0 0
    %775 = vmatmul.mubr.bf16.gmra.mrb[0].mxu0 %v614
    %v776 = vpop.f32.mrb[0].mxu0
    %v777 = vadd.f32 %v645, %v776
    %v778 = vpop.f32.mrb[0].mxu0
    %v779 = vpop.f32.mrb[0].mxu0
    %v780 = vadd.f32 %v645, %v779
    %v781 = vpop.f32.mrb[0].mxu0
    %782 = vmatprep.mubr.bf16.mxu0 0
    %783 = vmatmul.mubr.bf16.gmra.mrb[0].mxu0 %v615
    %v784 = vpop.f32.mrb[0].mxu0
    %v785 = vadd.f32 %v645, %v784
    %v786 = vpop.f32.mrb[0].mxu0
    %v787 = vpop.f32.mrb[0].mxu0
    %v788 = vadd.f32 %v645, %v787
    %v789 = vpop.f32.mrb[0].mxu0
    %790 = vmatprep.mubr.bf16.mxu0 0
    %791 = vmatmul.mubr.bf16.gmra.mrb[0].mxu0 %v616
    %v792 = vpop.f32.mrb[0].mxu0
    %v793 = vadd.f32 %v645, %v792
    %v794 = vpop.f32.mrb[0].mxu0
    %v795 = vpop.f32.mrb[0].mxu0
    %v796 = vadd.f32 %v645, %v795
    %v797 = vpop.f32.mrb[0].mxu0
    %798 = vmatprep.mubr.bf16.mxu0 0
    %799 = vmatmul.mubr.bf16.gmra.mrb[0].mxu0 %v617
    %v800 = vpop.f32.mrb[0].mxu0
    %v801 = vadd.f32 %v645, %v800
    %v802 = vpop.f32.mrb[0].mxu0
    %v803 = vpop.f32.mrb[0].mxu0
    %v804 = vadd.f32 %v645, %v803
    %v805 = vpop.f32.mrb[0].mxu0
    %806 = vmatprep.mubr.bf16.mxu0 0
    %807 = vmatmul.mubr.bf16.gmra.mrb[0].mxu0 %v618
    %v808 = vpop.f32.mrb[0].mxu0
    %v809 = vadd.f32 %v645, %v808
    %v810 = vpop.f32.mrb[0].mxu0
    %v811 = vpop.f32.mrb[0].mxu0
    %v812 = vadd.f32 %v645, %v811
    %v813 = vpop.f32.mrb[0].mxu0
    %814 = vmatprep.mubr.bf16.mxu0 0
    %815 = vmatmul.mubr.bf16.gmra.mrb[0].mxu0 %v619
    %v816 = vpop.f32.mrb[0].mxu0
    %v817 = vadd.f32 %v645, %v816
    %v818 = vpop.f32.mrb[0].mxu0
    %v819 = vpop.f32.mrb[0].mxu0
    %v820 = vadd.f32 %v645, %v819
    %v821 = vpop.f32.mrb[0].mxu0
    %822 = vmatprep.mubr.bf16.mxu0 0
    %823 = vmatmul.mubr.bf16.gmra.mrb[0].mxu0 %v620
    %v824 = vpop.f32.mrb[0].mxu0
    %v825 = vadd.f32 %v645, %v824
    %v826 = vpop.f32.mrb[0].mxu0
    %v827 = vpop.f32.mrb[0].mxu0
    %v828 = vadd.f32 %v645, %v827
    %v829 = vpop.f32.mrb[0].mxu0
    %830 = vmatprep.mubr.bf16.mxu0 0
    %831 = vmatmul.mubr.bf16.gmra.mrb[0].mxu0 %v621
    %v832 = vpop.f32.mrb[0].mxu0
    %v833 = vadd.f32 %v645, %v832
    %v834 = vpop.f32.mrb[0].mxu0
    %v835 = vpop.f32.mrb[0].mxu0
    %v836 = vadd.f32 %v645, %v835
    %v837 = vpop.f32.mrb[0].mxu0
    %838 = vmatprep.mubr.bf16.mxu0 0
    %839 = vmatmul.mubr.bf16.gmra.mrb[0].mxu0 %v622
    %v840 = vpop.f32.mrb[0].mxu0
    %v841 = vadd.f32 %v645, %v840
    %v842 = vpop.f32.mrb[0].mxu0
    %v843 = vpop.f32.mrb[0].mxu0
    %v844 = vadd.f32 %v645, %v843
    %v845 = vpop.f32.mrb[0].mxu0
    %846 = vmatprep.mubr.bf16.mxu0 0
    %847 = vmatmul.mubr.bf16.gmra.mrb[0].mxu0 %v623
    %v848 = vpop.f32.mrb[0].mxu0
    %v849 = vadd.f32 %v645, %v848
    %v850 = vpop.f32.mrb[0].mxu0
    %v851 = vpop.f32.mrb[0].mxu0
    %v852 = vadd.f32 %v645, %v851
    %v853 = vpop.f32.mrb[0].mxu0
    %854 = vdwg.mxu0
    %v855 = vtanh.pop %v729
    %v856 = vtanh.pop %v732
    %v857 = vtanh.pop %v737
    %v858 = vtanh.pop %v740
    %v859 = vtanh.pop %v745
    %v860 = vtanh.pop %v748
    %v861 = vtanh.pop %v753
    %v862 = vtanh.pop %v756
    %v863 = vtanh.pop %v761
    %v864 = vtanh.pop %v764
    %v865 = vtanh.pop %v769
    %v866 = vtanh.pop %v772
    %v867 = vtanh.pop %v777
    %v868 = vtanh.pop %v780
    %v869 = vtanh.pop %v785
    %v870 = vtanh.pop %v788
    %v871 = vtanh.pop %v793
    %v872 = vtanh.pop %v796
    %v873 = vtanh.pop %v801
    %v874 = vtanh.pop %v804
    %v875 = vtanh.pop %v809
    %v876 = vtanh.pop %v812
    %v877 = vtanh.pop %v817
    %v878 = vtanh.pop %v820
    %v879 = vtanh.pop %v825
    %v880 = vtanh.pop %v828
    %v881 = vtanh.pop %v833
    %v882 = vtanh.pop %v836
    %v883 = vtanh.pop %v841
    %v884 = vtanh.pop %v844
    %v885 = vtanh.pop %v849
    %v886 = vtanh.pop %v852
    %v887 = vpack.c.bf16 %v856, %v855
    %v888 = vpack.c.bf16 %v858, %v857
    %v889 = vpack.c.bf16 %v860, %v859
    %v890 = vpack.c.bf16 %v862, %v861
    %v891 = vpack.c.bf16 %v864, %v863
    %v892 = vpack.c.bf16 %v866, %v865
    %v893 = vpack.c.bf16 %v868, %v867
    %v894 = vpack.c.bf16 %v870, %v869
    %v895 = vpack.c.bf16 %v872, %v871
    %v896 = vpack.c.bf16 %v874, %v873
    %v897 = vpack.c.bf16 %v876, %v875
    %v898 = vpack.c.bf16 %v878, %v877
    %v899 = vpack.c.bf16 %v880, %v879
    %v900 = vpack.c.bf16 %v882, %v881
    %v901 = vpack.c.bf16 %v884, %v883
    %v902 = vpack.c.bf16 %v886, %v885
    %s903 = scalar_lea.vmem %s2, 128
    %v904 = vld [vmem:[%s903] sm:$0xf]
    %v905 = vld [vmem:[%s903 + $0x4] sm:$0xf]
    %v906 = vld [vmem:[%s903 + $0x8] sm:$0xf]
    %v907 = vld [vmem:[%s903 + $0xc] sm:$0xf]
    %v908 = vld [vmem:[%s903 + $0x10] sm:$0xf]
    %v909 = vld [vmem:[%s903 + $0x14] sm:$0xf]
    %v910 = vld [vmem:[%s903 + $0x18] sm:$0xf]
    %v911 = vld [vmem:[%s903 + $0x1c] sm:$0xf]
    %v912 = vld [vmem:[%s903 + $0x20] sm:$0xf]
    %v913 = vld [vmem:[%s903 + $0x24] sm:$0xf]
    %v914 = vld [vmem:[%s903 + $0x28] sm:$0xf]
    %v915 = vld [vmem:[%s903 + $0x2c] sm:$0xf]
    %v916 = vld [vmem:[%s903 + $0x30] sm:$0xf]
    %v917 = vld [vmem:[%s903 + $0x34] sm:$0xf]
    %v918 = vld [vmem:[%s903 + $0x38] sm:$0xf]
    %v919 = vld [vmem:[%s903 + $0x3c] sm:$0xf]
    %v920 = vld [vmem:[%s3 + $0x3] sm:$0x1]
    %v921 = vlaneseq
    %v922 = vshrl.u32 %v921, 7
    %v923 = vsub.s32 0, %v922
    %v924 = vrot.slane %v920, %v923
    %v941 = vunpack.c.l.b16 %v904
    %v942 = vunpack.c.l.b16 %v905
    %v943 = vunpack.c.l.b16 %v906
    %v944 = vunpack.c.l.b16 %v907
    %v945 = vunpack.c.l.b16 %v908
    %v946 = vunpack.c.l.b16 %v909
    %v947 = vunpack.c.l.b16 %v910
    %v948 = vunpack.c.l.b16 %v911
    %v949 = vunpack.c.l.b16 %v912
    %v950 = vunpack.c.l.b16 %v913
    %v951 = vunpack.c.l.b16 %v914
    %v952 = vunpack.c.l.b16 %v915
    %v953 = vunpack.c.l.b16 %v916
    %v954 = vunpack.c.l.b16 %v917
    %v955 = vunpack.c.l.b16 %v918
    %v956 = vunpack.c.l.b16 %v919
    %v957 = vpack.c.b16 %v942, %v941
    %v958 = vpack.c.b16 %v944, %v943
    %v959 = vpack.c.b16 %v946, %v945
    %v960 = vpack.c.b16 %v948, %v947
    %v961 = vpack.c.b16 %v950, %v949
    %v962 = vpack.c.b16 %v952, %v951
    %v963 = vpack.c.b16 %v954, %v953
    %v964 = vpack.c.b16 %v956, %v955
    %973 = vmatprep.subr.bf16.mxu0 0
    %974 = vmatpush1.bf16.msra.mxu0 %v957
    %975 = vmatprep.subr.bf16.mxu0 0
    %976 = vmatpush1.bf16.msra.mxu0 %v958
    %977 = vmatprep.subr.bf16.mxu0 0
    %978 = vmatpush1.bf16.msra.mxu0 %v959
    %979 = vmatprep.subr.bf16.mxu0 0
    %980 = vmatpush1.bf16.msra.mxu0 %v960
    %981 = vmatprep.subr.bf16.mxu0 0
    %982 = vmatpush1.bf16.msra.mxu0 %v961
    %983 = vmatprep.subr.bf16.mxu0 0
    %984 = vmatpush1.bf16.msra.mxu0 %v962
    %985 = vmatprep.subr.bf16.mxu0 0
    %986 = vmatpush1.bf16.msra.mxu0 %v963
    %987 = vmatprep.subr.bf16.mxu0 0
    %988 = vmatpush1.bf16.msra.mxu0 %v964
    %989 = vmatprep.subr.bf16.mxu0 0
    %990 = vmatpush1.bf16.msra.mxu0 0
    %991 = vmatprep.subr.bf16.mxu0 0
    %992 = vmatpush1.bf16.msra.mxu0 0
    %993 = vmatprep.subr.bf16.mxu0 0
    %994 = vmatpush1.bf16.msra.mxu0 0
    %995 = vmatprep.subr.bf16.mxu0 0
    %996 = vmatpush1.bf16.msra.mxu0 0
    %997 = vmatprep.subr.bf16.mxu0 0
    %998 = vmatpush1.bf16.msra.mxu0 0
    %999 = vmatprep.subr.bf16.mxu0 0
    %1000 = vmatpush1.bf16.msra.mxu0 0
    %1001 = vmatprep.subr.bf16.mxu0 0
    %1002 = vmatpush1.bf16.msra.mxu0 0
    %1003 = vmatprep.subr.bf16.mxu0 0
    %1004 = vmatpush1.bf16.msra.mxu0 0
    %1005 = vmatprep.mubr.bf16.mxu0 0
    %1006 = vmatmul.mubr.bf16.gmra.mrb[0].mxu0 %v887
    %v1007 = vpop.f32.mrb[0].mxu0
    %v1008 = vadd.f32 %v924, %v1007
    %v1009 = vpop.f32.mrb[0].mxu0
    %v1010 = vpop.f32.mrb[0].mxu0
    %v1011 = vadd.f32 %v924, %v1010
    %v1012 = vpop.f32.mrb[0].mxu0
    %1013 = vmatprep.mubr.bf16.mxu0 0
    %1014 = vmatmul.mubr.bf16.gmra.mrb[0].mxu0 %v888
    %v1015 = vpop.f32.mrb[0].mxu0
    %v1016 = vadd.f32 %v924, %v1015
    %v1017 = vpop.f32.mrb[0].mxu0
    %v1018 = vpop.f32.mrb[0].mxu0
    %v1019 = vadd.f32 %v924, %v1018
    %v1020 = vpop.f32.mrb[0].mxu0
    %1021 = vmatprep.mubr.bf16.mxu0 0
    %1022 = vmatmul.mubr.bf16.gmra.mrb[0].mxu0 %v889
    %v1023 = vpop.f32.mrb[0].mxu0
    %v1024 = vadd.f32 %v924, %v1023
    %v1025 = vpop.f32.mrb[0].mxu0
    %v1026 = vpop.f32.mrb[0].mxu0
    %v1027 = vadd.f32 %v924, %v1026
    %v1028 = vpop.f32.mrb[0].mxu0
    %1029 = vmatprep.mubr.bf16.mxu0 0
    %1030 = vmatmul.mubr.bf16.gmra.mrb[0].mxu0 %v890
    %v1031 = vpop.f32.mrb[0].mxu0
    %v1032 = vadd.f32 %v924, %v1031
    %v1033 = vpop.f32.mrb[0].mxu0
    %v1034 = vpop.f32.mrb[0].mxu0
    %v1035 = vadd.f32 %v924, %v1034
    %v1036 = vpop.f32.mrb[0].mxu0
    %1037 = vmatprep.mubr.bf16.mxu0 0
    %1038 = vmatmul.mubr.bf16.gmra.mrb[0].mxu0 %v891
    %v1039 = vpop.f32.mrb[0].mxu0
    %v1040 = vadd.f32 %v924, %v1039
    %v1041 = vpop.f32.mrb[0].mxu0
    %v1042 = vpop.f32.mrb[0].mxu0
    %v1043 = vadd.f32 %v924, %v1042
    %v1044 = vpop.f32.mrb[0].mxu0
    %1045 = vmatprep.mubr.bf16.mxu0 0
    %1046 = vmatmul.mubr.bf16.gmra.mrb[0].mxu0 %v892
    %v1047 = vpop.f32.mrb[0].mxu0
    %v1048 = vadd.f32 %v924, %v1047
    %v1049 = vpop.f32.mrb[0].mxu0
    %v1050 = vpop.f32.mrb[0].mxu0
    %v1051 = vadd.f32 %v924, %v1050
    %v1052 = vpop.f32.mrb[0].mxu0
    %1053 = vmatprep.mubr.bf16.mxu0 0
    %1054 = vmatmul.mubr.bf16.gmra.mrb[0].mxu0 %v893
    %v1055 = vpop.f32.mrb[0].mxu0
    %v1056 = vadd.f32 %v924, %v1055
    %v1057 = vpop.f32.mrb[0].mxu0
    %v1058 = vpop.f32.mrb[0].mxu0
    %v1059 = vadd.f32 %v924, %v1058
    %v1060 = vpop.f32.mrb[0].mxu0
    %1061 = vmatprep.mubr.bf16.mxu0 0
    %1062 = vmatmul.mubr.bf16.gmra.mrb[0].mxu0 %v894
    %v1063 = vpop.f32.mrb[0].mxu0
    %v1064 = vadd.f32 %v924, %v1063
    %v1065 = vpop.f32.mrb[0].mxu0
    %v1066 = vpop.f32.mrb[0].mxu0
    %v1067 = vadd.f32 %v924, %v1066
    %v1068 = vpop.f32.mrb[0].mxu0
    %1069 = vmatprep.mubr.bf16.mxu0 0
    %1070 = vmatmul.mubr.bf16.gmra.mrb[0].mxu0 %v895
    %v1071 = vpop.f32.mrb[0].mxu0
    %v1072 = vadd.f32 %v924, %v1071
    %v1073 = vpop.f32.mrb[0].mxu0
    %v1074 = vpop.f32.mrb[0].mxu0
    %v1075 = vadd.f32 %v924, %v1074
    %v1076 = vpop.f32.mrb[0].mxu0
    %1077 = vmatprep.mubr.bf16.mxu0 0
    %1078 = vmatmul.mubr.bf16.gmra.mrb[0].mxu0 %v896
    %v1079 = vpop.f32.mrb[0].mxu0
    %v1080 = vadd.f32 %v924, %v1079
    %v1081 = vpop.f32.mrb[0].mxu0
    %v1082 = vpop.f32.mrb[0].mxu0
    %v1083 = vadd.f32 %v924, %v1082
    %v1084 = vpop.f32.mrb[0].mxu0
    %1085 = vmatprep.mubr.bf16.mxu0 0
    %1086 = vmatmul.mubr.bf16.gmra.mrb[0].mxu0 %v897
    %v1087 = vpop.f32.mrb[0].mxu0
    %v1088 = vadd.f32 %v924, %v1087
    %v1089 = vpop.f32.mrb[0].mxu0
    %v1090 = vpop.f32.mrb[0].mxu0
    %v1091 = vadd.f32 %v924, %v1090
    %v1092 = vpop.f32.mrb[0].mxu0
    %1093 = vmatprep.mubr.bf16.mxu0 0
    %1094 = vmatmul.mubr.bf16.gmra.mrb[0].mxu0 %v898
    %v1095 = vpop.f32.mrb[0].mxu0
    %v1096 = vadd.f32 %v924, %v1095
    %v1097 = vpop.f32.mrb[0].mxu0
    %v1098 = vpop.f32.mrb[0].mxu0
    %v1099 = vadd.f32 %v924, %v1098
    %v1100 = vpop.f32.mrb[0].mxu0
    %1101 = vmatprep.mubr.bf16.mxu0 0
    %1102 = vmatmul.mubr.bf16.gmra.mrb[0].mxu0 %v899
    %v1103 = vpop.f32.mrb[0].mxu0
    %v1104 = vadd.f32 %v924, %v1103
    %v1105 = vpop.f32.mrb[0].mxu0
    %v1106 = vpop.f32.mrb[0].mxu0
    %v1107 = vadd.f32 %v924, %v1106
    %v1108 = vpop.f32.mrb[0].mxu0
    %1109 = vmatprep.mubr.bf16.mxu0 0
    %1110 = vmatmul.mubr.bf16.gmra.mrb[0].mxu0 %v900
    %v1111 = vpop.f32.mrb[0].mxu0
    %v1112 = vadd.f32 %v924, %v1111
    %v1113 = vpop.f32.mrb[0].mxu0
    %v1114 = vpop.f32.mrb[0].mxu0
    %v1115 = vadd.f32 %v924, %v1114
    %v1116 = vpop.f32.mrb[0].mxu0
    %1117 = vmatprep.mubr.bf16.mxu0 0
    %1118 = vmatmul.mubr.bf16.gmra.mrb[0].mxu0 %v901
    %v1119 = vpop.f32.mrb[0].mxu0
    %v1120 = vadd.f32 %v924, %v1119
    %v1121 = vpop.f32.mrb[0].mxu0
    %v1122 = vpop.f32.mrb[0].mxu0
    %v1123 = vadd.f32 %v924, %v1122
    %v1124 = vpop.f32.mrb[0].mxu0
    %1125 = vmatprep.mubr.bf16.mxu0 0
    %1126 = vmatmul.mubr.bf16.gmra.mrb[0].mxu0 %v902
    %v1127 = vpop.f32.mrb[0].mxu0
    %v1128 = vadd.f32 %v924, %v1127
    %v1129 = vpop.f32.mrb[0].mxu0
    %v1130 = vpop.f32.mrb[0].mxu0
    %v1131 = vadd.f32 %v924, %v1130
    %v1132 = vpop.f32.mrb[0].mxu0
    %1133 = vdwg.mxu0
    %v1134 = vtanh.pop %v1008
    %v1135 = vtanh.pop %v1011
    %v1136 = vtanh.pop %v1016
    %v1137 = vtanh.pop %v1019
    %v1138 = vtanh.pop %v1024
    %v1139 = vtanh.pop %v1027
    %v1140 = vtanh.pop %v1032
    %v1141 = vtanh.pop %v1035
    %v1142 = vtanh.pop %v1040
    %v1143 = vtanh.pop %v1043
    %v1144 = vtanh.pop %v1048
    %v1145 = vtanh.pop %v1051
    %v1146 = vtanh.pop %v1056
    %v1147 = vtanh.pop %v1059
    %v1148 = vtanh.pop %v1064
    %v1149 = vtanh.pop %v1067
    %v1150 = vtanh.pop %v1072
    %v1151 = vtanh.pop %v1075
    %v1152 = vtanh.pop %v1080
    %v1153 = vtanh.pop %v1083
    %v1154 = vtanh.pop %v1088
    %v1155 = vtanh.pop %v1091
    %v1156 = vtanh.pop %v1096
    %v1157 = vtanh.pop %v1099
    %v1158 = vtanh.pop %v1104
    %v1159 = vtanh.pop %v1107
    %v1160 = vtanh.pop %v1112
    %v1161 = vtanh.pop %v1115
    %v1162 = vtanh.pop %v1120
    %v1163 = vtanh.pop %v1123
    %v1164 = vtanh.pop %v1128
    %v1165 = vtanh.pop %v1131
    %v1166 = vpack.c.bf16 %v1135, %v1134
    %v1167 = vpack.c.bf16 %v1137, %v1136
    %v1168 = vpack.c.bf16 %v1139, %v1138
    %v1169 = vpack.c.bf16 %v1141, %v1140
    %v1170 = vpack.c.bf16 %v1143, %v1142
    %v1171 = vpack.c.bf16 %v1145, %v1144
    %v1172 = vpack.c.bf16 %v1147, %v1146
    %v1173 = vpack.c.bf16 %v1149, %v1148
    %v1174 = vpack.c.bf16 %v1151, %v1150
    %v1175 = vpack.c.bf16 %v1153, %v1152
    %v1176 = vpack.c.bf16 %v1155, %v1154
    %v1177 = vpack.c.bf16 %v1157, %v1156
    %v1178 = vpack.c.bf16 %v1159, %v1158
    %v1179 = vpack.c.bf16 %v1161, %v1160
    %v1180 = vpack.c.bf16 %v1163, %v1162
    %v1181 = vpack.c.bf16 %v1165, %v1164
    %s1182 = scalar_lea.vmem %s2, 192
    %v1183 = vld [vmem:[%s1182] sm:$0xf]
    %v1184 = vld [vmem:[%s1182 + $0x4] sm:$0xf]
    %v1185 = vld [vmem:[%s1182 + $0x8] sm:$0xf]
    %v1186 = vld [vmem:[%s1182 + $0xc] sm:$0xf]
    %v1187 = vld [vmem:[%s1182 + $0x10] sm:$0xf]
    %v1188 = vld [vmem:[%s1182 + $0x14] sm:$0xf]
    %v1189 = vld [vmem:[%s1182 + $0x18] sm:$0xf]
    %v1190 = vld [vmem:[%s1182 + $0x1c] sm:$0xf]
    %v1191 = vld [vmem:[%s1182 + $0x20] sm:$0xf]
    %v1192 = vld [vmem:[%s1182 + $0x24] sm:$0xf]
    %v1193 = vld [vmem:[%s1182 + $0x28] sm:$0xf]
    %v1194 = vld [vmem:[%s1182 + $0x2c] sm:$0xf]
    %v1195 = vld [vmem:[%s1182 + $0x30] sm:$0xf]
    %v1196 = vld [vmem:[%s1182 + $0x34] sm:$0xf]
    %v1197 = vld [vmem:[%s1182 + $0x38] sm:$0xf]
    %v1198 = vld [vmem:[%s1182 + $0x3c] sm:$0xf]
    %v1199 = vld [vmem:[%s3 + $0x4] sm:$0x1]
    %v1200 = vlaneseq
    %v1201 = vshrl.u32 %v1200, 7
    %v1202 = vsub.s32 0, %v1201
    %v1203 = vrot.slane %v1199, %v1202
    %v1220 = vunpack.c.l.b16 %v1183
    %v1221 = vunpack.c.l.b16 %v1184
    %v1222 = vunpack.c.l.b16 %v1185
    %v1223 = vunpack.c.l.b16 %v1186
    %v1224 = vunpack.c.l.b16 %v1187
    %v1225 = vunpack.c.l.b16 %v1188
    %v1226 = vunpack.c.l.b16 %v1189
    %v1227 = vunpack.c.l.b16 %v1190
    %v1228 = vunpack.c.l.b16 %v1191
    %v1229 = vunpack.c.l.b16 %v1192
    %v1230 = vunpack.c.l.b16 %v1193
    %v1231 = vunpack.c.l.b16 %v1194
    %v1232 = vunpack.c.l.b16 %v1195
    %v1233 = vunpack.c.l.b16 %v1196
    %v1234 = vunpack.c.l.b16 %v1197
    %v1235 = vunpack.c.l.b16 %v1198
    %v1236 = vpack.c.b16 %v1221, %v1220
    %v1237 = vpack.c.b16 %v1223, %v1222
    %v1238 = vpack.c.b16 %v1225, %v1224
    %v1239 = vpack.c.b16 %v1227, %v1226
    %v1240 = vpack.c.b16 %v1229, %v1228
    %v1241 = vpack.c.b16 %v1231, %v1230
    %v1242 = vpack.c.b16 %v1233, %v1232
    %v1243 = vpack.c.b16 %v1235, %v1234
    %1252 = vmatprep.subr.bf16.mxu0 0
    %1253 = vmatpush1.bf16.msra.mxu0 %v1236
    %1254 = vmatprep.subr.bf16.mxu0 0
    %1255 = vmatpush1.bf16.msra.mxu0 %v1237
    %1256 = vmatprep.subr.bf16.mxu0 0
    %1257 = vmatpush1.bf16.msra.mxu0 %v1238
    %1258 = vmatprep.subr.bf16.mxu0 0
    %1259 = vmatpush1.bf16.msra.mxu0 %v1239
    %1260 = vmatprep.subr.bf16.mxu0 0
    %1261 = vmatpush1.bf16.msra.mxu0 %v1240
    %1262 = vmatprep.subr.bf16.mxu0 0
    %1263 = vmatpush1.bf16.msra.mxu0 %v1241
    %1264 = vmatprep.subr.bf16.mxu0 0
    %1265 = vmatpush1.bf16.msra.mxu0 %v1242
    %1266 = vmatprep.subr.bf16.mxu0 0
    %1267 = vmatpush1.bf16.msra.mxu0 %v1243
    %1268 = vmatprep.subr.bf16.mxu0 0
    %1269 = vmatpush1.bf16.msra.mxu0 0
    %1270 = vmatprep.subr.bf16.mxu0 0
    %1271 = vmatpush1.bf16.msra.mxu0 0
    %1272 = vmatprep.subr.bf16.mxu0 0
    %1273 = vmatpush1.bf16.msra.mxu0 0
    %1274 = vmatprep.subr.bf16.mxu0 0
    %1275 = vmatpush1.bf16.msra.mxu0 0
    %1276 = vmatprep.subr.bf16.mxu0 0
    %1277 = vmatpush1.bf16.msra.mxu0 0
    %1278 = vmatprep.subr.bf16.mxu0 0
    %1279 = vmatpush1.bf16.msra.mxu0 0
    %1280 = vmatprep.subr.bf16.mxu0 0
    %1281 = vmatpush1.bf16.msra.mxu0 0
    %1282 = vmatprep.subr.bf16.mxu0 0
    %1283 = vmatpush1.bf16.msra.mxu0 0
    %1284 = vmatprep.mubr.bf16.mxu0 0
    %1285 = vmatmul.mubr.bf16.gmra.mrb[0].mxu0 %v1166
    %v1286 = vpop.f32.mrb[0].mxu0
    %v1287 = vadd.f32 %v1203, %v1286
    %v1288 = vpop.f32.mrb[0].mxu0
    %v1289 = vpop.f32.mrb[0].mxu0
    %v1290 = vadd.f32 %v1203, %v1289
    %v1291 = vpop.f32.mrb[0].mxu0
    %1292 = vmatprep.mubr.bf16.mxu0 0
    %1293 = vmatmul.mubr.bf16.gmra.mrb[0].mxu0 %v1167
    %v1294 = vpop.f32.mrb[0].mxu0
    %v1295 = vadd.f32 %v1203, %v1294
    %v1296 = vpop.f32.mrb[0].mxu0
    %v1297 = vpop.f32.mrb[0].mxu0
    %v1298 = vadd.f32 %v1203, %v1297
    %v1299 = vpop.f32.mrb[0].mxu0
    %1300 = vmatprep.mubr.bf16.mxu0 0
    %1301 = vmatmul.mubr.bf16.gmra.mrb[0].mxu0 %v1168
    %v1302 = vpop.f32.mrb[0].mxu0
    %v1303 = vadd.f32 %v1203, %v1302
    %v1304 = vpop.f32.mrb[0].mxu0
    %v1305 = vpop.f32.mrb[0].mxu0
    %v1306 = vadd.f32 %v1203, %v1305
    %v1307 = vpop.f32.mrb[0].mxu0
    %1308 = vmatprep.mubr.bf16.mxu0 0
    %1309 = vmatmul.mubr.bf16.gmra.mrb[0].mxu0 %v1169
    %v1310 = vpop.f32.mrb[0].mxu0
    %v1311 = vadd.f32 %v1203, %v1310
    %v1312 = vpop.f32.mrb[0].mxu0
    %v1313 = vpop.f32.mrb[0].mxu0
    %v1314 = vadd.f32 %v1203, %v1313
    %v1315 = vpop.f32.mrb[0].mxu0
    %1316 = vmatprep.mubr.bf16.mxu0 0
    %1317 = vmatmul.mubr.bf16.gmra.mrb[0].mxu0 %v1170
    %v1318 = vpop.f32.mrb[0].mxu0
    %v1319 = vadd.f32 %v1203, %v1318
    %v1320 = vpop.f32.mrb[0].mxu0
    %v1321 = vpop.f32.mrb[0].mxu0
    %v1322 = vadd.f32 %v1203, %v1321
    %v1323 = vpop.f32.mrb[0].mxu0
    %1324 = vmatprep.mubr.bf16.mxu0 0
    %1325 = vmatmul.mubr.bf16.gmra.mrb[0].mxu0 %v1171
    %v1326 = vpop.f32.mrb[0].mxu0
    %v1327 = vadd.f32 %v1203, %v1326
    %v1328 = vpop.f32.mrb[0].mxu0
    %v1329 = vpop.f32.mrb[0].mxu0
    %v1330 = vadd.f32 %v1203, %v1329
    %v1331 = vpop.f32.mrb[0].mxu0
    %1332 = vmatprep.mubr.bf16.mxu0 0
    %1333 = vmatmul.mubr.bf16.gmra.mrb[0].mxu0 %v1172
    %v1334 = vpop.f32.mrb[0].mxu0
    %v1335 = vadd.f32 %v1203, %v1334
    %v1336 = vpop.f32.mrb[0].mxu0
    %v1337 = vpop.f32.mrb[0].mxu0
    %v1338 = vadd.f32 %v1203, %v1337
    %v1339 = vpop.f32.mrb[0].mxu0
    %1340 = vmatprep.mubr.bf16.mxu0 0
    %1341 = vmatmul.mubr.bf16.gmra.mrb[0].mxu0 %v1173
    %v1342 = vpop.f32.mrb[0].mxu0
    %v1343 = vadd.f32 %v1203, %v1342
    %v1344 = vpop.f32.mrb[0].mxu0
    %v1345 = vpop.f32.mrb[0].mxu0
    %v1346 = vadd.f32 %v1203, %v1345
    %v1347 = vpop.f32.mrb[0].mxu0
    %1348 = vmatprep.mubr.bf16.mxu0 0
    %1349 = vmatmul.mubr.bf16.gmra.mrb[0].mxu0 %v1174
    %v1350 = vpop.f32.mrb[0].mxu0
    %v1351 = vadd.f32 %v1203, %v1350
    %v1352 = vpop.f32.mrb[0].mxu0
    %v1353 = vpop.f32.mrb[0].mxu0
    %v1354 = vadd.f32 %v1203, %v1353
    %v1355 = vpop.f32.mrb[0].mxu0
    %1356 = vmatprep.mubr.bf16.mxu0 0
    %1357 = vmatmul.mubr.bf16.gmra.mrb[0].mxu0 %v1175
    %v1358 = vpop.f32.mrb[0].mxu0
    %v1359 = vadd.f32 %v1203, %v1358
    %v1360 = vpop.f32.mrb[0].mxu0
    %v1361 = vpop.f32.mrb[0].mxu0
    %v1362 = vadd.f32 %v1203, %v1361
    %v1363 = vpop.f32.mrb[0].mxu0
    %1364 = vmatprep.mubr.bf16.mxu0 0
    %1365 = vmatmul.mubr.bf16.gmra.mrb[0].mxu0 %v1176
    %v1366 = vpop.f32.mrb[0].mxu0
    %v1367 = vadd.f32 %v1203, %v1366
    %v1368 = vpop.f32.mrb[0].mxu0
    %v1369 = vpop.f32.mrb[0].mxu0
    %v1370 = vadd.f32 %v1203, %v1369
    %v1371 = vpop.f32.mrb[0].mxu0
    %1372 = vmatprep.mubr.bf16.mxu0 0
    %1373 = vmatmul.mubr.bf16.gmra.mrb[0].mxu0 %v1177
    %v1374 = vpop.f32.mrb[0].mxu0
    %v1375 = vadd.f32 %v1203, %v1374
    %v1376 = vpop.f32.mrb[0].mxu0
    %v1377 = vpop.f32.mrb[0].mxu0
    %v1378 = vadd.f32 %v1203, %v1377
    %v1379 = vpop.f32.mrb[0].mxu0
    %1380 = vmatprep.mubr.bf16.mxu0 0
    %1381 = vmatmul.mubr.bf16.gmra.mrb[0].mxu0 %v1178
    %v1382 = vpop.f32.mrb[0].mxu0
    %v1383 = vadd.f32 %v1203, %v1382
    %v1384 = vpop.f32.mrb[0].mxu0
    %v1385 = vpop.f32.mrb[0].mxu0
    %v1386 = vadd.f32 %v1203, %v1385
    %v1387 = vpop.f32.mrb[0].mxu0
    %1388 = vmatprep.mubr.bf16.mxu0 0
    %1389 = vmatmul.mubr.bf16.gmra.mrb[0].mxu0 %v1179
    %v1390 = vpop.f32.mrb[0].mxu0
    %v1391 = vadd.f32 %v1203, %v1390
    %v1392 = vpop.f32.mrb[0].mxu0
    %v1393 = vpop.f32.mrb[0].mxu0
    %v1394 = vadd.f32 %v1203, %v1393
    %v1395 = vpop.f32.mrb[0].mxu0
    %1396 = vmatprep.mubr.bf16.mxu0 0
    %1397 = vmatmul.mubr.bf16.gmra.mrb[0].mxu0 %v1180
    %v1398 = vpop.f32.mrb[0].mxu0
    %v1399 = vadd.f32 %v1203, %v1398
    %v1400 = vpop.f32.mrb[0].mxu0
    %v1401 = vpop.f32.mrb[0].mxu0
    %v1402 = vadd.f32 %v1203, %v1401
    %v1403 = vpop.f32.mrb[0].mxu0
    %1404 = vmatprep.mubr.bf16.mxu0 0
    %1405 = vmatmul.mubr.bf16.gmra.mrb[0].mxu0 %v1181
    %v1406 = vpop.f32.mrb[0].mxu0
    %v1407 = vadd.f32 %v1203, %v1406
    %v1408 = vpop.f32.mrb[0].mxu0
    %v1409 = vpop.f32.mrb[0].mxu0
    %v1410 = vadd.f32 %v1203, %v1409
    %v1411 = vpop.f32.mrb[0].mxu0
    %1412 = vdwg.mxu0
    %1413 = vst [vmem:[#allocation2] sm:$0xff] %v1287
    %1414 = vst [vmem:[#allocation2 + $0x8] sm:$0xff] %v1290
    %1415 = vst [vmem:[#allocation2 + $0x10] sm:$0xff] %v1295
    %1416 = vst [vmem:[#allocation2 + $0x18] sm:$0xff] %v1298
    %1417 = vst [vmem:[#allocation2 + $0x20] sm:$0xff] %v1303
    %1418 = vst [vmem:[#allocation2 + $0x28] sm:$0xff] %v1306
    %1419 = vst [vmem:[#allocation2 + $0x30] sm:$0xff] %v1311
    %1420 = vst [vmem:[#allocation2 + $0x38] sm:$0xff] %v1314
    %1421 = vst [vmem:[#allocation2 + $0x40] sm:$0xff] %v1319
    %1422 = vst [vmem:[#allocation2 + $0x48] sm:$0xff] %v1322
    %1423 = vst [vmem:[#allocation2 + $0x50] sm:$0xff] %v1327
    %1424 = vst [vmem:[#allocation2 + $0x58] sm:$0xff] %v1330
    %1425 = vst [vmem:[#allocation2 + $0x60] sm:$0xff] %v1335
    %1426 = vst [vmem:[#allocation2 + $0x68] sm:$0xff] %v1338
    %1427 = vst [vmem:[#allocation2 + $0x70] sm:$0xff] %v1343
    %1428 = vst [vmem:[#allocation2 + $0x78] sm:$0xff] %v1346
    %1429 = vst [vmem:[#allocation2 + $0x80] sm:$0xff] %v1351
    %1430 = vst [vmem:[#allocation2 + $0x88] sm:$0xff] %v1354
    %1431 = vst [vmem:[#allocation2 + $0x90] sm:$0xff] %v1359
    %1432 = vst [vmem:[#allocation2 + $0x98] sm:$0xff] %v1362
    %1433 = vst [vmem:[#allocation2 + $0xa0] sm:$0xff] %v1367
    %1434 = vst [vmem:[#allocation2 + $0xa8] sm:$0xff] %v1370
    %1435 = vst [vmem:[#allocation2 + $0xb0] sm:$0xff] %v1375
    %1436 = vst [vmem:[#allocation2 + $0xb8] sm:$0xff] %v1378
    %1437 = vst [vmem:[#allocation2 + $0xc0] sm:$0xff] %v1383
    %1438 = vst [vmem:[#allocation2 + $0xc8] sm:$0xff] %v1386
    %1439 = vst [vmem:[#allocation2 + $0xd0] sm:$0xff] %v1391
    %1440 = vst [vmem:[#allocation2 + $0xd8] sm:$0xff] %v1394
    %1441 = vst [vmem:[#allocation2 + $0xe0] sm:$0xff] %v1399
    %1442 = vst [vmem:[#allocation2 + $0xe8] sm:$0xff] %v1402
    %1443 = vst [vmem:[#allocation2 + $0xf0] sm:$0xff] %v1407
    %1444 = vst [vmem:[#allocation2 + $0xf8] sm:$0xff] %v1410
    // Predicated region
    $region18: #{tpu_custom_call.1} parent=1 // pred_check
      _
    $region19: #{tpu_custom_call.1} parent=1 // pred_check_branch
      %1446 = sbr.rel (0) target = $region21
    $region20: #{tpu_custom_call.1} parent=1 // pred_region
      %s1448 = ssub.s32 4096, 4096
      %1449 = vsyncadd [#allocation3], %s1448
      %s1450 = sshll.u32 [#allocation2], 4
      %s1451 = int_to_ptr.vmem [resolvable:$true] %s1450
      %1456 = dma.vmem_to_hbm [thread:$0]  %s1451, 4096, %s4, [#allocation3], 128, 128, 8
    $region21: #{tpu_custom_call.1} parent=1 // pred_fallthru
      _
    // Predicated region
    $region22: #{tpu_custom_call.1} parent=1 // pred_check
      _
    $region23: #{tpu_custom_call.1} parent=1 // pred_check_branch
      %1458 = sbr.rel (0) target = $region25
    $region24: #{tpu_custom_call.1} parent=1 // pred_region
      %1459 = dma.done [#allocation3], 4096
    $region25: #{tpu_custom_call.1} parent=1 // pred_fallthru
      _
    %1460 = vsyncpa [#allocation3], 1

</llo_original>
